<compile_context>
chip_gen: v6e
topology: v6e:2x2x1
jax: 0.10.0
libtpu: 0.0.40
codegen_flags: <defaults>
</compile_context>

<pallas_src>
import functools

import jax
import jax.numpy as jnp
from jax import lax
from jax.experimental import pallas as pl
from jax.experimental.pallas import tpu as pltpu

_INV_SQRT2 = 0.7071067811865476
_MIB = 1024 * 1024


def _gelu_f32(x, approximate):
    if approximate:
        # tanh approximation -> EUP (own bundle slot), cheaper than the erf polynomial.
        return jax.nn.gelu(x, approximate=True)
    # PyTorch nn.GELU() default: exact erf-based GELU, in f32.
    return 0.5 * x * (1.0 + lax.erf(x * _INV_SQRT2))


# ---------------------------------------------------------------------------
# Kernels
# ---------------------------------------------------------------------------

def _projection_head_kernel(x_ref, w1t_ref, b1_ref, wft_ref, bf_ref, o_ref,
                            *, n_sub, approximate_gelu):
    w1t = w1t_ref[...]            # (D, D) bf16, pre-transposed (in, out) - shared Linear
    wft = wft_ref[...]            # (D, D) bf16, pre-transposed
    b1 = b1_ref[...]              # (1, D) f32
    bf = bf_ref[...]              # (1, D) f32

    tb = x_ref.shape[0]
    sub = tb // n_sub
    # Independent row sub-tiles: no data deps between iterations, so the LLO scheduler
    # can co-issue one sub-tile's MXU pushes with the other's GELU/cast VALU work.
    for s in range(n_sub):
        rows = pl.ds(s * sub, sub)
        x = x_ref[rows, :].astype(jnp.bfloat16)   # VPU cast, hidden under DMA/MXU

        # block #1: Linear1 (bf16 MXU, f32 acc) -> bias (f32) -> GELU (f32)
        h = jnp.dot(x, w1t, preferred_element_type=jnp.float32) + b1
        h = _gelu_f32(h, approximate_gelu)
        # TODO(synk): training-mode dropout (Bernoulli mask via pltpu.prng_*) not emitted;
        #             eval-mode identity only.

        # block #2: the SAME Linear1 (shared weights) -> bias -> GELU
        h = jnp.dot(h.astype(jnp.bfloat16), w1t, preferred_element_type=jnp.float32) + b1
        h = _gelu_f32(h, approximate_gelu)

        # final Linear
        y = jnp.dot(h.astype(jnp.bfloat16), wft, preferred_element_type=jnp.float32) + bf
        o_ref[rows, :] = y.astype(o_ref.dtype)


def _linear_act_kernel(x_ref, wt_ref, b_ref, o_ref, *, apply_gelu, approximate_gelu):
    # Single Linear (+ optional GELU) for the large-D split path.
    x = x_ref[...].astype(jnp.bfloat16)
    y = jnp.dot(x, wt_ref[...], preferred_element_type=jnp.float32) + b_ref[...]
    if apply_gelu:
        y = _gelu_f32(y, approximate_gelu)
    o_ref[...] = y.astype(o_ref.dtype)


# ---------------------------------------------------------------------------
# Generation-aware sizing helpers
# ---------------------------------------------------------------------------

def _tpu_topology():
    """Best-effort (num_tensorcores_per_chip, physical_vmem_bytes); safe fallbacks."""
    num_tc, vmem_bytes = 1, 128 * _MIB          # v5e / v6e defaults
    try:
        kind = jax.devices()[0].device_kind.lower()
    except Exception:
        kind = ""
    if "v7" in kind:
        num_tc, vmem_bytes = 2, 64 * _MIB       # v7x: 2 TCs, 64 MiB VMEM per TC
    try:
        vmem_bytes = int(pltpu.get_tpu_info().vmem_capacity_bytes)
    except Exception:
        pass
    return num_tc, vmem_bytes


def _pick_tb(B, D, *, num_tc, x_itemsize, out_itemsize, resident_bytes, vmem_budget_bytes):
    """Row tile: largest divisor of B whose footprint fits the VMEM budget.
    Single-TC chips (v5e/v6e) take one big step; on v7x the step count must be a
    multiple of num_tc so both TensorCores get equal work."""
    avail = max(vmem_budget_bytes - resident_bytes, 2 * _MIB)
    # double-buffered x & out tiles + ~3x f32 intermediates per row
    bytes_per_row = 2 * D * x_itemsize + 2 * D * out_itemsize + 3 * D * 4

    divisors = sorted((d for d in range(1, B + 1) if B % d == 0), reverse=True)
    cands = [d for d in divisors if d >= 16] or divisors        # floor at 16 rows (bf16 tiles)
    fitting = [d for d in cands if d * bytes_per_row <= avail] or [cands[-1]]
    if num_tc > 1:
        balanced = [d for d in fitting if (B // d) % num_tc == 0]
        if balanced:
            return balanced[0]
    return fitting[0]


def _vmem_limit_bytes(tb, D, *, x_itemsize, out_itemsize, n_weights, physical_vmem_bytes):
    weights = n_weights * D * D * 2                      # bf16 weights, single-buffered
    biases = 2 * 8 * max(D, 128) * 4                     # padded (8,128) f32 bias tiles
    acts = 2 * tb * D * x_itemsize + 2 * tb * D * out_itemsize   # double-buffered in/out
    scratch = 4 * tb * D * 4                             # f32 intermediates / bf16 casts
    limit = int((weights + biases + acts + scratch) * 1.25) + 4 * _MIB
    limit = max(limit, 16 * _MIB)                        # never below the smallest default
    return min(limit, int(physical_vmem_bytes * 0.9))    # leave headroom


def _const_spec(block_shape, single_buffer):
    # Loop-invariant block (index_map always (0,0)): single-buffer to halve its VMEM cost.
    kwargs = {"pipeline_mode": pl.Buffered(1)} if single_buffer else {}
    return pl.BlockSpec(block_shape, lambda i: (0, 0), **kwargs)


# ---------------------------------------------------------------------------
# Parameter preparation (ONE-TIME, hoisted out of the per-call wrapper)
# ---------------------------------------------------------------------------

def prepare_projection_head_params(w1, b1, wf, bf):
    """One-time layout/dtype prep: pre-transpose Linear weights to (in, out) and cast
    to bf16; biases to f32 row vectors. Call once (e.g. at model init) and reuse."""
    D_out, D_in = w1.shape
    assert b1.shape == (D_out,)
    w1t = jnp.transpose(w1).astype(jnp.bfloat16)          # (D_in, D_out)
    wft = jnp.transpose(wf).astype(jnp.bfloat16)          # (D_out, D_out)
    b1_2d = b1.reshape(1, -1).astype(jnp.float32)
    bf_2d = bf.reshape(1, -1).astype(jnp.float32)
    return w1t, b1_2d, wft, bf_2d


# ---------------------------------------------------------------------------
# pallas_call wrappers
# ---------------------------------------------------------------------------

def _projection_head_fused(x, w1t, b1_2d, wft, bf_2d, *, tb, physical_vmem,
                           approximate_gelu, out_dtype, single_buffer_constants):
    B, D = x.shape
    n_sub = 2 if (tb % 32 == 0 and tb >= 64) else 1
    vmem_limit = _vmem_limit_bytes(
        tb, D, x_itemsize=x.dtype.itemsize, out_itemsize=jnp.dtype(out_dtype).itemsize,
        n_weights=2, physical_vmem_bytes=physical_vmem)

    flops = 2 * B * 3 * D * D
    transcendentals = 2 * B * D
    bytes_accessed = (x.size * x.dtype.itemsize + w1t.size * 2 + wft.size * 2
                      + b1_2d.size * 4 + bf_2d.size * 4
                      + B * D * jnp.dtype(out_dtype).itemsize)
    cost = pl.CostEstimate(flops=flops, transcendentals=transcendentals,
                           bytes_accessed=bytes_accessed)

    kernel = functools.partial(_projection_head_kernel, n_sub=n_sub,
                               approximate_gelu=approximate_gelu)
    return pl.pallas_call(
        kernel,
        out_shape=jax.ShapeDtypeStruct((B, D), out_dtype),
        grid_spec=pltpu.PrefetchScalarGridSpec(
            num_scalar_prefetch=0,
            grid=(B // tb,),
            in_specs=[
                pl.BlockSpec((tb, D), lambda i: (i, 0)),          # x tile (pipelined)
                _const_spec((D, D), single_buffer_constants),     # W1^T (shared Linear)
                _const_spec((1, D), single_buffer_constants),     # b1
                _const_spec((D, D), single_buffer_constants),     # W_final^T
                _const_spec((1, D), single_buffer_constants),     # b_final
            ],
            out_specs=pl.BlockSpec((tb, D), lambda i: (i, 0)),
        ),
        compiler_params=pltpu.CompilerParams(
            dimension_semantics=("parallel",),
            vmem_limit_bytes=vmem_limit,
        ),
        cost_estimate=cost,
    )(x, w1t, b1_2d, wft, bf_2d)


def _linear_pallas(x, wt, b_2d, *, apply_gelu, approximate_gelu, out_dtype, tb,
                   physical_vmem, single_buffer_constants):
    B, D_in = x.shape
    D_out = wt.shape[1]
    vmem_limit = _vmem_limit_bytes(
        tb, max(D_in, D_out), x_itemsize=x.dtype.itemsize,
        out_itemsize=jnp.dtype(out_dtype).itemsize, n_weights=1,
        physical_vmem_bytes=physical_vmem)
    kernel = functools.partial(_linear_act_kernel, apply_gelu=apply_gelu,
                               approximate_gelu=approximate_gelu)
    return pl.pallas_call(
        kernel,
        out_shape=jax.ShapeDtypeStruct((B, D_out), out_dtype),
        grid_spec=pltpu.PrefetchScalarGridSpec(
            num_scalar_prefetch=0,
            grid=(B // tb,),
            in_specs=[
                pl.BlockSpec((tb, D_in), lambda i: (i, 0)),
                _const_spec((D_in, D_out), single_buffer_constants),
                _const_spec((1, D_out), single_buffer_constants),
            ],
            out_specs=pl.BlockSpec((tb, D_out), lambda i: (i, 0)),
        ),
        compiler_params=pltpu.CompilerParams(
            dimension_semantics=("parallel",),
            vmem_limit_bytes=vmem_limit,
        ),
    )(x, wt, b_2d)


def projection_head(x, params, *, tb=None, approximate_gelu=False, force_split=False):
    """Eval-mode forward of ProjectionHead.

    x: (B, D) activations (any float dtype; cast to bf16 inside the kernel).
    params: output of prepare_projection_head_params(w1, b1, wf, bf) (one-time prep).
    """
    w1t, b1_2d, wft, bf_2d = params
    B, D_in = x.shape
    D_in_w, D_out = w1t.shape
    assert D_in_w == D_in, "w1 must be (out_features, in_features) before prep"
    # The shared first Linear is applied to both the raw input and its own output,
    # so the module only makes sense when input_dim == output_dim.
    assert D_in == D_out, "ProjectionHead's shared Linear requires input_dim == output_dim"
    assert wft.shape == (D_out, D_out)
    assert b1_2d.shape == (1, D_out) and bf_2d.shape == (1, D_out)

    out_dtype = x.dtype
    num_tc, physical_vmem = _tpu_topology()

    # If both bf16 weights can't sit resident next to the activation tiles
    # (e.g. D >= ~3200 on v7x's 64 MiB VMEM), fall back to single-weight calls.
    fused_weight_bytes = 2 * D_out * D_out * 2
    use_split = force_split or fused_weight_bytes > int(0.6 * physical_vmem)
    # TODO(synk): for D where even one (D,D) bf16 weight exceeds VMEM, add a K-tiled
    #             streaming variant (emit_pipeline over column blocks + f32 accumulator).

    if tb is None:
        n_resident = 1 if use_split else 2
        resident = n_resident * D_out * D_out * 2 + 2 * 8 * max(D_out, 128) * 4
        tb = _pick_tb(B, D_out, num_tc=num_tc,
                      x_itemsize=x.dtype.itemsize,
                      out_itemsize=jnp.dtype(out_dtype).itemsize,
                      resident_bytes=resident,
                      vmem_budget_bytes=int(physical_vmem * 0.8))
    assert B % tb == 0, f"batch {B} must be divisible by row tile {tb}"

    def _forward(single_buffer_constants):
        if not use_split:
            return _projection_head_fused(
                x, w1t, b1_2d, wft, bf_2d, tb=tb, physical_vmem=physical_vmem,
                approximate_gelu=approximate_gelu, out_dtype=out_dtype,
                single_buffer_constants=single_buffer_constants)
        # Large-D fallback: one resident weight per call; bf16 intermediates so the
        # next call's MXU operand is identical to the fused path's h.astype(bf16).
        h = _linear_pallas(x, w1t, b1_2d, apply_gelu=True,
                           approximate_gelu=approximate_gelu, out_dtype=jnp.bfloat16,
                           tb=tb, physical_vmem=physical_vmem,
                           single_buffer_constants=single_buffer_constants)
        h = _linear_pallas(h, w1t, b1_2d, apply_gelu=True,
                           approximate_gelu=approximate_gelu, out_dtype=jnp.bfloat16,
                           tb=tb, physical_vmem=physical_vmem,
                           single_buffer_constants=single_buffer_constants)
        return _linear_pallas(h, wft, bf_2d, apply_gelu=False,
                              approximate_gelu=approximate_gelu, out_dtype=out_dtype,
                              tb=tb, physical_vmem=physical_vmem,
                              single_buffer_constants=single_buffer_constants)

    try:
        return _forward(True)
    except Exception:
        # pl.Buffered(1) (single-buffering of loop-invariant weight blocks) is a pure
        # VMEM optimization; fall back to default double-buffering if this JAX/Mosaic
        # build rejects pipeline_mode on pallas_call BlockSpecs.
        return _forward(False)


# ---------------------------------------------------------------------------
# Pure-JAX reference (same precision contract as the kernel)
# ---------------------------------------------------------------------------

def projection_head_ref(x, w1, b1, wf, bf, *, approximate_gelu=False):
    def gelu(v):
        if approximate_gelu:
            return jax.nn.gelu(v, approximate=True)
        return 0.5 * v * (1.0 + lax.erf(v * _INV_SQRT2))

    xb = x.astype(jnp.bfloat16)
    w1t = jnp.transpose(w1).astype(jnp.bfloat16)
    wft = jnp.transpose(wf).astype(jnp.bfloat16)
    b1f = b1.astype(jnp.float32)
    bff = bf.astype(jnp.float32)

    h = jnp.dot(xb, w1t, preferred_element_type=jnp.float32) + b1f
    h = gelu(h)
    h = jnp.dot(h.astype(jnp.bfloat16), w1t, preferred_element_type=jnp.float32) + b1f
    h = gelu(h)
    y = jnp.dot(h.astype(jnp.bfloat16), wft, preferred_element_type=jnp.float32) + bff
    return y.astype(x.dtype)


if __name__ == "__main__":
    # Small shapes consistent with the module (input_dim == output_dim required by the
    # shared-Linear structure). D is a multiple of 128 for lane tiling; B=256 exercises
    # the tiling heuristic (one 256-row step on single-TC v5e/v6e, 2 balanced steps on v7x).
    B, D = 256, 128

    key = jax.random.PRNGKey(0)
    kx, kw1, kb1, kwf, kbf = jax.random.split(key, 5)

    x = jax.random.normal(kx, (B, D), dtype=jnp.float32)
    # Deterministic synthetic "Linear" params in PyTorch (out, in) layout.
    w1 = jax.random.normal(kw1, (D, D), dtype=jnp.float32) * (1.0 / jnp.sqrt(D))
    b1 = jax.random.normal(kb1, (D,), dtype=jnp.float32) * 0.01
    wf = jax.random.normal(kwf, (D, D), dtype=jnp.float32) * (1.0 / jnp.sqrt(D))
    bf = jax.random.normal(kbf, (D,), dtype=jnp.float32) * 0.01

    params = prepare_projection_head_params(w1, b1, wf, bf)   # one-time prep (hoisted)
    ref = projection_head_ref(x, w1, b1, wf, bf)

    out = jax.block_until_ready(projection_head(x, params))
    assert out.shape == (B, D)
    assert jnp.allclose(out, ref, atol=1e-2, rtol=1e-2), "fused kernel mismatch vs reference"

    # Also exercise the large-D (v7x) split fallback path once so it stays compile-clean.
    out_split = jax.block_until_ready(projection_head(x, params, force_split=True))
    assert jnp.allclose(out_split, ref, atol=1e-2, rtol=1e-2), "split path mismatch vs reference"

    print("KERNEL_OK")
</pallas_src>

<mosaic_0001>
module attributes {stable_mosaic.version = 11 : i64} {
  func.func @_projection_head_kernel(%arg0: i32, %arg1: memref<256x128xf32, #tpu.memory_space<vmem>>, %arg2: memref<128x128xbf16, #tpu.memory_space<vmem>>, %arg3: memref<1x128xf32, #tpu.memory_space<vmem>>, %arg4: memref<128x128xbf16, #tpu.memory_space<vmem>>, %arg5: memref<1x128xf32, #tpu.memory_space<vmem>>, %arg6: memref<256x128xf32, #tpu.memory_space<vmem>>) attributes {dimension_semantics = [#tpu.dimension_semantics<parallel>], iteration_bounds = array<i64: 1>, scalar_prefetch = 0 : i64, scratch_operands = 0 : i64, tpu.core_type = #tpu.core_type<tc>, window_params = [{transform_indices = @transform_0, window_bounds = array<i64: 256, 128>}, {pipeline_mode = #tpu.pipeline_mode<synchronous>, transform_indices = @transform_1, window_bounds = array<i64: 128, 128>}, {pipeline_mode = #tpu.pipeline_mode<synchronous>, transform_indices = @transform_2, window_bounds = array<i64: 1, 128>}, {pipeline_mode = #tpu.pipeline_mode<synchronous>, transform_indices = @transform_3, window_bounds = array<i64: 128, 128>}, {pipeline_mode = #tpu.pipeline_mode<synchronous>, transform_indices = @transform_4, window_bounds = array<i64: 1, 128>}, {transform_indices = @transform_5, window_bounds = array<i64: 256, 128>}]} {
    %c0 = arith.constant 0 : index
    %c0_0 = arith.constant 0 : index
    %0 = vector.load %arg2[%c0, %c0_0] : memref<128x128xbf16, #tpu.memory_space<vmem>>, vector<128x128xbf16>
    %c0_1 = arith.constant 0 : index
    %c0_2 = arith.constant 0 : index
    %1 = vector.load %arg4[%c0_1, %c0_2] : memref<128x128xbf16, #tpu.memory_space<vmem>>, vector<128x128xbf16>
    %c0_3 = arith.constant 0 : index
    %c0_4 = arith.constant 0 : index
    %2 = vector.load %arg3[%c0_3, %c0_4] : memref<1x128xf32, #tpu.memory_space<vmem>>, vector<1x128xf32>
    %c0_5 = arith.constant 0 : index
    %c0_6 = arith.constant 0 : index
    %3 = vector.load %arg5[%c0_5, %c0_6] : memref<1x128xf32, #tpu.memory_space<vmem>>, vector<1x128xf32>
    %c0_7 = arith.constant 0 : index
    %c0_8 = arith.constant 0 : index
    %4 = vector.load %arg1[%c0_7, %c0_8] : memref<256x128xf32, #tpu.memory_space<vmem>>, vector<128x128xf32>
    %5 = arith.truncf %4 : vector<128x128xf32> to vector<128x128xbf16>
    %cst = arith.constant dense<0.000000e+00> : vector<128x128xf32>
    %6 = tpu.matmul %5, %0, %cst {dimension_numbers = #tpu.dot_dimension_numbers<[1], [0], [0], [1], [0, 0, 1, 1], [], []>} : vector<128x128xbf16>, vector<128x128xbf16>, vector<128x128xf32> -> vector<128x128xf32>
    %7 = vector.broadcast %2 : vector<1x128xf32> to vector<128x128xf32>
    %8 = arith.addf %6, %7 : vector<128x128xf32>
    %cst_9 = arith.constant 5.000000e-01 : f32
    %9 = vector.broadcast %cst_9 : f32 to vector<128x128xf32>
    %10 = arith.mulf %9, %8 : vector<128x128xf32>
    %cst_10 = arith.constant 0.707106769 : f32
    %11 = vector.broadcast %cst_10 : f32 to vector<128x128xf32>
    %12 = arith.mulf %8, %11 : vector<128x128xf32>
    %13 = math.erf %12 : vector<128x128xf32>
    %cst_11 = arith.constant 1.000000e+00 : f32
    %14 = vector.broadcast %cst_11 : f32 to vector<128x128xf32>
    %15 = arith.addf %14, %13 : vector<128x128xf32>
    %16 = arith.mulf %10, %15 : vector<128x128xf32>
    %17 = arith.truncf %16 : vector<128x128xf32> to vector<128x128xbf16>
    %cst_12 = arith.constant dense<0.000000e+00> : vector<128x128xf32>
    %18 = tpu.matmul %17, %0, %cst_12 {dimension_numbers = #tpu.dot_dimension_numbers<[1], [0], [0], [1], [0, 0, 1, 1], [], []>} : vector<128x128xbf16>, vector<128x128xbf16>, vector<128x128xf32> -> vector<128x128xf32>
    %19 = vector.broadcast %2 : vector<1x128xf32> to vector<128x128xf32>
    %20 = arith.addf %18, %19 : vector<128x128xf32>
    %cst_13 = arith.constant 5.000000e-01 : f32
    %21 = vector.broadcast %cst_13 : f32 to vector<128x128xf32>
    %22 = arith.mulf %21, %20 : vector<128x128xf32>
    %cst_14 = arith.constant 0.707106769 : f32
    %23 = vector.broadcast %cst_14 : f32 to vector<128x128xf32>
    %24 = arith.mulf %20, %23 : vector<128x128xf32>
    %25 = math.erf %24 : vector<128x128xf32>
    %cst_15 = arith.constant 1.000000e+00 : f32
    %26 = vector.broadcast %cst_15 : f32 to vector<128x128xf32>
    %27 = arith.addf %26, %25 : vector<128x128xf32>
    %28 = arith.mulf %22, %27 : vector<128x128xf32>
    %29 = arith.truncf %28 : vector<128x128xf32> to vector<128x128xbf16>
    %cst_16 = arith.constant dense<0.000000e+00> : vector<128x128xf32>
    %30 = tpu.matmul %29, %1, %cst_16 {dimension_numbers = #tpu.dot_dimension_numbers<[1], [0], [0], [1], [0, 0, 1, 1], [], []>} : vector<128x128xbf16>, vector<128x128xbf16>, vector<128x128xf32> -> vector<128x128xf32>
    %31 = vector.broadcast %3 : vector<1x128xf32> to vector<128x128xf32>
    %32 = arith.addf %30, %31 : vector<128x128xf32>
    %c0_17 = arith.constant 0 : index
    %c0_18 = arith.constant 0 : index
    %33 = vector.load %arg6[%c0_17, %c0_18] : memref<256x128xf32, #tpu.memory_space<vmem>>, vector<128x128xf32>
    tpu.vector_store %arg6[%c0_17, %c0_18], %32 {strides = array<i32>} : memref<256x128xf32, #tpu.memory_space<vmem>>, vector<128x128xf32>,
    %c128 = arith.constant 128 : index
    %c0_19 = arith.constant 0 : index
    %34 = vector.load %arg1[%c128, %c0_19] : memref<256x128xf32, #tpu.memory_space<vmem>>, vector<128x128xf32>
    %35 = arith.truncf %34 : vector<128x128xf32> to vector<128x128xbf16>
    %cst_20 = arith.constant dense<0.000000e+00> : vector<128x128xf32>
    %36 = tpu.matmul %35, %0, %cst_20 {dimension_numbers = #tpu.dot_dimension_numbers<[1], [0], [0], [1], [0, 0, 1, 1], [], []>} : vector<128x128xbf16>, vector<128x128xbf16>, vector<128x128xf32> -> vector<128x128xf32>
    %37 = vector.broadcast %2 : vector<1x128xf32> to vector<128x128xf32>
    %38 = arith.addf %36, %37 : vector<128x128xf32>
    %cst_21 = arith.constant 5.000000e-01 : f32
    %39 = vector.broadcast %cst_21 : f32 to vector<128x128xf32>
    %40 = arith.mulf %39, %38 : vector<128x128xf32>
    %cst_22 = arith.constant 0.707106769 : f32
    %41 = vector.broadcast %cst_22 : f32 to vector<128x128xf32>
    %42 = arith.mulf %38, %41 : vector<128x128xf32>
    %43 = math.erf %42 : vector<128x128xf32>
    %cst_23 = arith.constant 1.000000e+00 : f32
    %44 = vector.broadcast %cst_23 : f32 to vector<128x128xf32>
    %45 = arith.addf %44, %43 : vector<128x128xf32>
    %46 = arith.mulf %40, %45 : vector<128x128xf32>
    %47 = arith.truncf %46 : vector<128x128xf32> to vector<128x128xbf16>
    %cst_24 = arith.constant dense<0.000000e+00> : vector<128x128xf32>
    %48 = tpu.matmul %47, %0, %cst_24 {dimension_numbers = #tpu.dot_dimension_numbers<[1], [0], [0], [1], [0, 0, 1, 1], [], []>} : vector<128x128xbf16>, vector<128x128xbf16>, vector<128x128xf32> -> vector<128x128xf32>
    %49 = vector.broadcast %2 : vector<1x128xf32> to vector<128x128xf32>
    %50 = arith.addf %48, %49 : vector<128x128xf32>
    %cst_25 = arith.constant 5.000000e-01 : f32
    %51 = vector.broadcast %cst_25 : f32 to vector<128x128xf32>
    %52 = arith.mulf %51, %50 : vector<128x128xf32>
    %cst_26 = arith.constant 0.707106769 : f32
    %53 = vector.broadcast %cst_26 : f32 to vector<128x128xf32>
    %54 = arith.mulf %50, %53 : vector<128x128xf32>
    %55 = math.erf %54 : vector<128x128xf32>
    %cst_27 = arith.constant 1.000000e+00 : f32
    %56 = vector.broadcast %cst_27 : f32 to vector<128x128xf32>
    %57 = arith.addf %56, %55 : vector<128x128xf32>
    %58 = arith.mulf %52, %57 : vector<128x128xf32>
    %59 = arith.truncf %58 : vector<128x128xf32> to vector<128x128xbf16>
    %cst_28 = arith.constant dense<0.000000e+00> : vector<128x128xf32>
    %60 = tpu.matmul %59, %1, %cst_28 {dimension_numbers = #tpu.dot_dimension_numbers<[1], [0], [0], [1], [0, 0, 1, 1], [], []>} : vector<128x128xbf16>, vector<128x128xbf16>, vector<128x128xf32> -> vector<128x128xf32>
    %61 = vector.broadcast %3 : vector<1x128xf32> to vector<128x128xf32>
    %62 = arith.addf %60, %61 : vector<128x128xf32>
    %c128_29 = arith.constant 128 : index
    %c0_30 = arith.constant 0 : index
    %63 = vector.load %arg6[%c128_29, %c0_30] : memref<256x128xf32, #tpu.memory_space<vmem>>, vector<128x128xf32>
    tpu.vector_store %arg6[%c128_29, %c0_30], %62 {strides = array<i32>} : memref<256x128xf32, #tpu.memory_space<vmem>>, vector<128x128xf32>,
    return
  }
  func.func @transform_0(%arg0: i32) -> (i32, i32) {
    %c0_i32 = arith.constant 0 : i32
    %c0_i32_0 = arith.constant 0 : i32
    return %arg0, %c0_i32 : i32, i32
  }
  func.func @transform_1(%arg0: i32) -> (i32, i32) {
    %c0_i32 = arith.constant 0 : i32
    %c0_i32_0 = arith.constant 0 : i32
    %c0_i32_1 = arith.constant 0 : i32
    return %c0_i32, %c0_i32_0 : i32, i32
  }
  func.func @transform_2(%arg0: i32) -> (i32, i32) {
    %c0_i32 = arith.constant 0 : i32
    %c0_i32_0 = arith.constant 0 : i32
    %c0_i32_1 = arith.constant 0 : i32
    return %c0_i32, %c0_i32_0 : i32, i32
  }
  func.func @transform_3(%arg0: i32) -> (i32, i32) {
    %c0_i32 = arith.constant 0 : i32
    %c0_i32_0 = arith.constant 0 : i32
    %c0_i32_1 = arith.constant 0 : i32
    return %c0_i32, %c0_i32_0 : i32, i32
  }
  func.func @transform_4(%arg0: i32) -> (i32, i32) {
    %c0_i32 = arith.constant 0 : i32
    %c0_i32_0 = arith.constant 0 : i32
    %c0_i32_1 = arith.constant 0 : i32
    return %c0_i32, %c0_i32_0 : i32, i32
  }
  func.func @transform_5(%arg0: i32) -> (i32, i32) {
    %c0_i32 = arith.constant 0 : i32
    %c0_i32_0 = arith.constant 0 : i32
    return %arg0, %c0_i32 : i32, i32
  }
}

module attributes {stable_mosaic.version = 11 : i64} {
  func.func @_projection_head_kernel(%arg0: i32, %arg1: memref<256x128xf32, #tpu.memory_space<vmem>>, %arg2: memref<128x128xbf16, #tpu.memory_space<vmem>>, %arg3: memref<1x128xf32, #tpu.memory_space<vmem>>, %arg4: memref<128x128xbf16, #tpu.memory_space<vmem>>, %arg5: memref<1x128xf32, #tpu.memory_space<vmem>>, %arg6: memref<256x128xf32, #tpu.memory_space<vmem>>) attributes {dimension_semantics = [#tpu.dimension_semantics<parallel>], iteration_bounds = array<i64: 1>, scalar_prefetch = 0 : i64, scratch_operands = 0 : i64, tpu.core_type = #tpu.core_type<tc>, window_params = [{transform_indices = @transform_0, window_bounds = array<i64: 256, 128>}, {pipeline_mode = #tpu.pipeline_mode<synchronous>, transform_indices = @transform_1, window_bounds = array<i64: 128, 128>}, {pipeline_mode = #tpu.pipeline_mode<synchronous>, transform_indices = @transform_2, window_bounds = array<i64: 1, 128>}, {pipeline_mode = #tpu.pipeline_mode<synchronous>, transform_indices = @transform_3, window_bounds = array<i64: 128, 128>}, {pipeline_mode = #tpu.pipeline_mode<synchronous>, transform_indices = @transform_4, window_bounds = array<i64: 1, 128>}, {transform_indices = @transform_5, window_bounds = array<i64: 256, 128>}]} {
    %c0 = arith.constant 0 : index
    %c0_0 = arith.constant 0 : index
    %0 = vector.load %arg2[%c0, %c0_0] : memref<128x128xbf16, #tpu.memory_space<vmem>>, vector<128x128xbf16>
    %c0_1 = arith.constant 0 : index
    %c0_2 = arith.constant 0 : index
    %1 = vector.load %arg4[%c0_1, %c0_2] : memref<128x128xbf16, #tpu.memory_space<vmem>>, vector<128x128xbf16>
    %c0_3 = arith.constant 0 : index
    %c0_4 = arith.constant 0 : index
    %2 = vector.load %arg3[%c0_3, %c0_4] : memref<1x128xf32, #tpu.memory_space<vmem>>, vector<1x128xf32>
    %c0_5 = arith.constant 0 : index
    %c0_6 = arith.constant 0 : index
    %3 = vector.load %arg5[%c0_5, %c0_6] : memref<1x128xf32, #tpu.memory_space<vmem>>, vector<1x128xf32>
    %c0_7 = arith.constant 0 : index
    %c0_8 = arith.constant 0 : index
    %4 = vector.load %arg1[%c0_7, %c0_8] : memref<256x128xf32, #tpu.memory_space<vmem>>, vector<128x128xf32>
    %5 = arith.truncf %4 : vector<128x128xf32> to vector<128x128xbf16>
    %cst = arith.constant dense<0.000000e+00> : vector<128x128xf32>
    %6 = tpu.matmul %5, %0, %cst {dimension_numbers = #tpu.dot_dimension_numbers<[1], [0], [0], [1], [0, 0, 1, 1], [], []>} : vector<128x128xbf16>, vector<128x128xbf16>, vector<128x128xf32> -> vector<128x128xf32>
    %7 = vector.broadcast %2 : vector<1x128xf32> to vector<128x128xf32>
    %8 = arith.addf %6, %7 : vector<128x128xf32>
    %cst_9 = arith.constant 5.000000e-01 : f32
    %9 = vector.broadcast %cst_9 : f32 to vector<128x128xf32>
    %10 = arith.mulf %9, %8 : vector<128x128xf32>
    %cst_10 = arith.constant 0.707106769 : f32
    %11 = vector.broadcast %cst_10 : f32 to vector<128x128xf32>
    %12 = arith.mulf %8, %11 : vector<128x128xf32>
    %13 = math.erf %12 : vector<128x128xf32>
    %cst_11 = arith.constant 1.000000e+00 : f32
    %14 = vector.broadcast %cst_11 : f32 to vector<128x128xf32>
    %15 = arith.addf %14, %13 : vector<128x128xf32>
    %16 = arith.mulf %10, %15 : vector<128x128xf32>
    %17 = arith.truncf %16 : vector<128x128xf32> to vector<128x128xbf16>
    %cst_12 = arith.constant dense<0.000000e+00> : vector<128x128xf32>
    %18 = tpu.matmul %17, %0, %cst_12 {dimension_numbers = #tpu.dot_dimension_numbers<[1], [0], [0], [1], [0, 0, 1, 1], [], []>} : vector<128x128xbf16>, vector<128x128xbf16>, vector<128x128xf32> -> vector<128x128xf32>
    %19 = vector.broadcast %2 : vector<1x128xf32> to vector<128x128xf32>
    %20 = arith.addf %18, %19 : vector<128x128xf32>
    %cst_13 = arith.constant 5.000000e-01 : f32
    %21 = vector.broadcast %cst_13 : f32 to vector<128x128xf32>
    %22 = arith.mulf %21, %20 : vector<128x128xf32>
    %cst_14 = arith.constant 0.707106769 : f32
    %23 = vector.broadcast %cst_14 : f32 to vector<128x128xf32>
    %24 = arith.mulf %20, %23 : vector<128x128xf32>
    %25 = math.erf %24 : vector<128x128xf32>
    %cst_15 = arith.constant 1.000000e+00 : f32
    %26 = vector.broadcast %cst_15 : f32 to vector<128x128xf32>
    %27 = arith.addf %26, %25 : vector<128x128xf32>
    %28 = arith.mulf %22, %27 : vector<128x128xf32>
    %29 = arith.truncf %28 : vector<128x128xf32> to vector<128x128xbf16>
    %cst_16 = arith.constant dense<0.000000e+00> : vector<128x128xf32>
    %30 = tpu.matmul %29, %1, %cst_16 {dimension_numbers = #tpu.dot_dimension_numbers<[1], [0], [0], [1], [0, 0, 1, 1], [], []>} : vector<128x128xbf16>, vector<128x128xbf16>, vector<128x128xf32> -> vector<128x128xf32>
    %31 = vector.broadcast %3 : vector<1x128xf32> to vector<128x128xf32>
    %32 = arith.addf %30, %31 : vector<128x128xf32>
    %c0_17 = arith.constant 0 : index
    %c0_18 = arith.constant 0 : index
    %33 = vector.load %arg6[%c0_17, %c0_18] : memref<256x128xf32, #tpu.memory_space<vmem>>, vector<128x128xf32>
    tpu.vector_store %arg6[%c0_17, %c0_18], %32 {strides = array<i32>} : memref<256x128xf32, #tpu.memory_space<vmem>>, vector<128x128xf32>,
    %c128 = arith.constant 128 : index
    %c0_19 = arith.constant 0 : index
    %34 = vector.load %arg1[%c128, %c0_19] : memref<256x128xf32, #tpu.memory_space<vmem>>, vector<128x128xf32>
    %35 = arith.truncf %34 : vector<128x128xf32> to vector<128x128xbf16>
    %cst_20 = arith.constant dense<0.000000e+00> : vector<128x128xf32>
    %36 = tpu.matmul %35, %0, %cst_20 {dimension_numbers = #tpu.dot_dimension_numbers<[1], [0], [0], [1], [0, 0, 1, 1], [], []>} : vector<128x128xbf16>, vector<128x128xbf16>, vector<128x128xf32> -> vector<128x128xf32>
    %37 = vector.broadcast %2 : vector<1x128xf32> to vector<128x128xf32>
    %38 = arith.addf %36, %37 : vector<128x128xf32>
    %cst_21 = arith.constant 5.000000e-01 : f32
    %39 = vector.broadcast %cst_21 : f32 to vector<128x128xf32>
    %40 = arith.mulf %39, %38 : vector<128x128xf32>
    %cst_22 = arith.constant 0.707106769 : f32
    %41 = vector.broadcast %cst_22 : f32 to vector<128x128xf32>
    %42 = arith.mulf %38, %41 : vector<128x128xf32>
    %43 = math.erf %42 : vector<128x128xf32>
    %cst_23 = arith.constant 1.000000e+00 : f32
    %44 = vector.broadcast %cst_23 : f32 to vector<128x128xf32>
    %45 = arith.addf %44, %43 : vector<128x128xf32>
    %46 = arith.mulf %40, %45 : vector<128x128xf32>
    %47 = arith.truncf %46 : vector<128x128xf32> to vector<128x128xbf16>
    %cst_24 = arith.constant dense<0.000000e+00> : vector<128x128xf32>
    %48 = tpu.matmul %47, %0, %cst_24 {dimension_numbers = #tpu.dot_dimension_numbers<[1], [0], [0], [1], [0, 0, 1, 1], [], []>} : vector<128x128xbf16>, vector<128x128xbf16>, vector<128x128xf32> -> vector<128x128xf32>
    %49 = vector.broadcast %2 : vector<1x128xf32> to vector<128x128xf32>
    %50 = arith.addf %48, %49 : vector<128x128xf32>
    %cst_25 = arith.constant 5.000000e-01 : f32
    %51 = vector.broadcast %cst_25 : f32 to vector<128x128xf32>
    %52 = arith.mulf %51, %50 : vector<128x128xf32>
    %cst_26 = arith.constant 0.707106769 : f32
    %53 = vector.broadcast %cst_26 : f32 to vector<128x128xf32>
    %54 = arith.mulf %50, %53 : vector<128x128xf32>
    %55 = math.erf %54 : vector<128x128xf32>
    %cst_27 = arith.constant 1.000000e+00 : f32
    %56 = vector.broadcast %cst_27 : f32 to vector<128x128xf32>
    %57 = arith.addf %56, %55 : vector<128x128xf32>
    %58 = arith.mulf %52, %57 : vector<128x128xf32>
    %59 = arith.truncf %58 : vector<128x128xf32> to vector<128x128xbf16>
    %cst_28 = arith.constant dense<0.000000e+00> : vector<128x128xf32>
    %60 = tpu.matmul %59, %1, %cst_28 {dimension_numbers = #tpu.dot_dimension_numbers<[1], [0], [0], [1], [0, 0, 1, 1], [], []>} : vector<128x128xbf16>, vector<128x128xbf16>, vector<128x128xf32> -> vector<128x128xf32>
    %61 = vector.broadcast %3 : vector<1x128xf32> to vector<128x128xf32>
    %62 = arith.addf %60, %61 : vector<128x128xf32>
    %c128_29 = arith.constant 128 : index
    %c0_30 = arith.constant 0 : index
    %63 = vector.load %arg6[%c128_29, %c0_30] : memref<256x128xf32, #tpu.memory_space<vmem>>, vector<128x128xf32>
    tpu.vector_store %arg6[%c128_29, %c0_30], %62 {strides = array<i32>} : memref<256x128xf32, #tpu.memory_space<vmem>>, vector<128x128xf32>,
    return
  }
  func.func @transform_0(%arg0: i32) -> (i32, i32) {
    %c0_i32 = arith.constant 0 : i32
    %c0_i32_0 = arith.constant 0 : i32
    return %arg0, %c0_i32 : i32, i32
  }
  func.func @transform_1(%arg0: i32) -> (i32, i32) {
    %c0_i32 = arith.constant 0 : i32
    %c0_i32_0 = arith.constant 0 : i32
    %c0_i32_1 = arith.constant 0 : i32
    return %c0_i32, %c0_i32_0 : i32, i32
  }
  func.func @transform_2(%arg0: i32) -> (i32, i32) {
    %c0_i32 = arith.constant 0 : i32
    %c0_i32_0 = arith.constant 0 : i32
    %c0_i32_1 = arith.constant 0 : i32
    return %c0_i32, %c0_i32_0 : i32, i32
  }
  func.func @transform_3(%arg0: i32) -> (i32, i32) {
    %c0_i32 = arith.constant 0 : i32
    %c0_i32_0 = arith.constant 0 : i32
    %c0_i32_1 = arith.constant 0 : i32
    return %c0_i32, %c0_i32_0 : i32, i32
  }
  func.func @transform_4(%arg0: i32) -> (i32, i32) {
    %c0_i32 = arith.constant 0 : i32
    %c0_i32_0 = arith.constant 0 : i32
    %c0_i32_1 = arith.constant 0 : i32
    return %c0_i32, %c0_i32_0 : i32, i32
  }
  func.func @transform_5(%arg0: i32) -> (i32, i32) {
    %c0_i32 = arith.constant 0 : i32
    %c0_i32_0 = arith.constant 0 : i32
    return %arg0, %c0_i32 : i32, i32
  }
}

</mosaic_0001>

<llo_original>
// kernel: tpu_custom_call.1
$region0: #{tpu_custom_call.1}
  #allocation0 [shape = 'u32[]', space=smem, size = 0x4, offset = 0x4, fixed_abs, tag = 'smem constant byte address 0x4 - core index']
  #allocation1 [shape = 'u32[144,128]{1,0:T(1,128)}', space=vmem, size = 0x12000, scoped, tag = 'internal scratch']
  %s0 = inlined_call_operand.hbm [shape: f32[256,128], index: 0, kind: input, shape index: {}]
  %s1 = inlined_call_operand.hbm [shape: bf16[128,128], index: 1, kind: input, shape index: {}]
  %s2 = inlined_call_operand.vmem [shape: f32[1,128], index: 2, kind: input, shape index: {}]
  %s3 = inlined_call_operand.hbm [shape: bf16[128,128], index: 3, kind: input, shape index: {}]
  %s4 = inlined_call_operand.vmem [shape: f32[1,128], index: 4, kind: input, shape index: {}]
  %s5 = inlined_call_operand.hbm [shape: f32[256,128], index: 5, kind: output, shape index: {}]
  %s6 = sld [smem:[#allocation0]]
  $region42: #{tpu_custom_call.1} parent=0
    _
  %s8 = ssub.s32 1, %s6
  %s9 = scalar_select 0, %s8, %s6
  $region1: #{tpu_custom_call.1} parent=0
    #allocation2 [shape = 'u8[131072]{0}', space=vmem, size = 0x20000, scoped, tag = 'input window, operand 0, single buffered']
    #allocation3 [shape = 's32[1]{0}', space=sflag, size = 0x4, scoped, tag = 'scoped memory for tpu_custom_call.1']
    #allocation4 [shape = 's32[1]{0}', space=sflag, size = 0x4, scoped, tag = 'scoped memory for tpu_custom_call.1']
    #allocation5 [shape = 'u8[32768]{0}', space=vmem, size = 0x8000, scoped, tag = 'input window, operand 1, single buffered']
    #allocation6 [shape = 's32[1]{0}', space=sflag, size = 0x4, scoped, tag = 'scoped memory for tpu_custom_call.1']
    #allocation7 [shape = 'u8[32768]{0}', space=vmem, size = 0x8000, scoped, tag = 'input window, operand 3, single buffered']
    #allocation8 [shape = 'u8[131072]{0}', space=vmem, size = 0x20000, scoped, tag = 'output window, operand 0, single buffered']
    %10 = vsyncpa [#allocation3], 0
    %11 = vsyncpa [#allocation6], 0
    %12 = vsyncpa [#allocation4], 0
    // Predicated region
    $region2: #{tpu_custom_call.1} parent=1 // pred_check
      _
    $region3: #{tpu_custom_call.1} parent=1 // pred_check_branch
      %14 = sbr.rel (0) target = $region5
    $region4: #{tpu_custom_call.1} parent=1 // pred_region
      %s16 = ssub.s32 4096, 4096
      %17 = vsyncadd [#allocation3], %s16
      %s18 = sshll.u32 [#allocation2], 4
      %s19 = int_to_ptr.vmem [resolvable:$true] %s18
      %24 = dma.hbm_to_vmem [thread:$0]  %s0, 4096, %s19, [#allocation3], 128, 128, 8
    $region5: #{tpu_custom_call.1} parent=1 // pred_fallthru
      _
    // Predicated region
    $region6: #{tpu_custom_call.1} parent=1 // pred_check
      _
    $region7: #{tpu_custom_call.1} parent=1 // pred_check_branch
      %26 = sbr.rel (0) target = $region9
    $region8: #{tpu_custom_call.1} parent=1 // pred_region
      %s28 = ssub.s32 1024, 1024
      %29 = vsyncadd [#allocation6], %s28
      %s30 = sshll.u32 [#allocation5], 4
      %s31 = int_to_ptr.vmem [resolvable:$true] %s30
      %36 = dma.hbm_to_vmem [thread:$0]  %s1, 1024, %s31, [#allocation6], 64, 64, 4
    $region9: #{tpu_custom_call.1} parent=1 // pred_fallthru
      _
    // Predicated region
    $region10: #{tpu_custom_call.1} parent=1 // pred_check
      _
    $region11: #{tpu_custom_call.1} parent=1 // pred_check_branch
      %38 = sbr.rel (0) target = $region13
    $region12: #{tpu_custom_call.1} parent=1 // pred_region
      _
    $region13: #{tpu_custom_call.1} parent=1 // pred_fallthru
      _
    // Predicated region
    $region14: #{tpu_custom_call.1} parent=1 // pred_check
      _
    $region15: #{tpu_custom_call.1} parent=1 // pred_check_branch
      %40 = sbr.rel (0) target = $region17
    $region16: #{tpu_custom_call.1} parent=1 // pred_region
      %s42 = ssub.s32 1024, 1024
      %43 = vsyncadd [#allocation6], %s42
      %s44 = sshll.u32 [#allocation7], 4
      %s45 = int_to_ptr.vmem [resolvable:$true] %s44
      %50 = dma.hbm_to_vmem [thread:$0]  %s3, 1024, %s45, [#allocation6], 64, 64, 4
    $region17: #{tpu_custom_call.1} parent=1 // pred_fallthru
      _
    // Predicated region
    $region18: #{tpu_custom_call.1} parent=1 // pred_check
      _
    $region19: #{tpu_custom_call.1} parent=1 // pred_check_branch
      %52 = sbr.rel (0) target = $region21
    $region20: #{tpu_custom_call.1} parent=1 // pred_region
      _
    $region21: #{tpu_custom_call.1} parent=1 // pred_fallthru
      _
    // Predicated region
    $region22: #{tpu_custom_call.1} parent=1 // pred_check
      _
    $region23: #{tpu_custom_call.1} parent=1 // pred_check_branch
      %54 = sbr.rel (0) target = $region25
    $region24: #{tpu_custom_call.1} parent=1 // pred_region
      %55 = dma.done [#allocation3], 4096
    $region25: #{tpu_custom_call.1} parent=1 // pred_fallthru
      _
    // Predicated region
    $region26: #{tpu_custom_call.1} parent=1 // pred_check
      _
    $region27: #{tpu_custom_call.1} parent=1 // pred_check_branch
      %57 = sbr.rel (0) target = $region29
    $region28: #{tpu_custom_call.1} parent=1 // pred_region
      %58 = dma.done [#allocation6], 1024
    $region29: #{tpu_custom_call.1} parent=1 // pred_fallthru
      _
    // Predicated region
    $region30: #{tpu_custom_call.1} parent=1 // pred_check
      _
    $region31: #{tpu_custom_call.1} parent=1 // pred_check_branch
      %60 = sbr.rel (0) target = $region33
    $region32: #{tpu_custom_call.1} parent=1 // pred_region
      %61 = dma.done [#allocation6], 1024
    $region33: #{tpu_custom_call.1} parent=1 // pred_fallthru
      _
    %v63 = vld [vmem:[#allocation5] sm:$0xf]
    %v64 = vld [vmem:[#allocation5 + $0x4] sm:$0xf]
    %v65 = vld [vmem:[#allocation5 + $0x8] sm:$0xf]
    %v66 = vld [vmem:[#allocation5 + $0xc] sm:$0xf]
    %v67 = vld [vmem:[#allocation5 + $0x10] sm:$0xf]
    %v68 = vld [vmem:[#allocation5 + $0x14] sm:$0xf]
    %v69 = vld [vmem:[#allocation5 + $0x18] sm:$0xf]
    %v70 = vld [vmem:[#allocation5 + $0x1c] sm:$0xf]
    %v71 = vld [vmem:[#allocation5 + $0x20] sm:$0xf]
    %v72 = vld [vmem:[#allocation5 + $0x24] sm:$0xf]
    %v73 = vld [vmem:[#allocation5 + $0x28] sm:$0xf]
    %v74 = vld [vmem:[#allocation5 + $0x2c] sm:$0xf]
    %v75 = vld [vmem:[#allocation5 + $0x30] sm:$0xf]
    %v76 = vld [vmem:[#allocation5 + $0x34] sm:$0xf]
    %v77 = vld [vmem:[#allocation5 + $0x38] sm:$0xf]
    %v78 = vld [vmem:[#allocation5 + $0x3c] sm:$0xf]
    %v79 = vld [vmem:[#allocation7] sm:$0xf]
    %v80 = vld [vmem:[#allocation7 + $0x4] sm:$0xf]
    %v81 = vld [vmem:[#allocation7 + $0x8] sm:$0xf]
    %v82 = vld [vmem:[#allocation7 + $0xc] sm:$0xf]
    %v83 = vld [vmem:[#allocation7 + $0x10] sm:$0xf]
    %v84 = vld [vmem:[#allocation7 + $0x14] sm:$0xf]
    %v85 = vld [vmem:[#allocation7 + $0x18] sm:$0xf]
    %v86 = vld [vmem:[#allocation7 + $0x1c] sm:$0xf]
    %v87 = vld [vmem:[#allocation7 + $0x20] sm:$0xf]
    %v88 = vld [vmem:[#allocation7 + $0x24] sm:$0xf]
    %v89 = vld [vmem:[#allocation7 + $0x28] sm:$0xf]
    %v90 = vld [vmem:[#allocation7 + $0x2c] sm:$0xf]
    %v91 = vld [vmem:[#allocation7 + $0x30] sm:$0xf]
    %v92 = vld [vmem:[#allocation7 + $0x34] sm:$0xf]
    %v93 = vld [vmem:[#allocation7 + $0x38] sm:$0xf]
    %v94 = vld [vmem:[#allocation7 + $0x3c] sm:$0xf]
    %v95 = vld [vmem:[%s2] sm:$0x1]
    %v96 = vld [vmem:[%s4] sm:$0x1]
    %v97 = vld [vmem:[#allocation2] sm:$0xff]
    %v98 = vld [vmem:[#allocation2 + $0x8] sm:$0xff]
    %v99 = vld [vmem:[#allocation2 + $0x10] sm:$0xff]
    %v100 = vld [vmem:[#allocation2 + $0x18] sm:$0xff]
    %v101 = vld [vmem:[#allocation2 + $0x20] sm:$0xff]
    %v102 = vld [vmem:[#allocation2 + $0x28] sm:$0xff]
    %v103 = vld [vmem:[#allocation2 + $0x30] sm:$0xff]
    %v104 = vld [vmem:[#allocation2 + $0x38] sm:$0xff]
    %v105 = vld [vmem:[#allocation2 + $0x40] sm:$0xff]
    %v106 = vld [vmem:[#allocation2 + $0x48] sm:$0xff]
    %v107 = vld [vmem:[#allocation2 + $0x50] sm:$0xff]
    %v108 = vld [vmem:[#allocation2 + $0x58] sm:$0xff]
    %v109 = vld [vmem:[#allocation2 + $0x60] sm:$0xff]
    %v110 = vld [vmem:[#allocation2 + $0x68] sm:$0xff]
    %v111 = vld [vmem:[#allocation2 + $0x70] sm:$0xff]
    %v112 = vld [vmem:[#allocation2 + $0x78] sm:$0xff]
    %v113 = vpack.c.bf16 %v98, %v97
    %v114 = vpack.c.bf16 %v100, %v99
    %v115 = vpack.c.bf16 %v102, %v101
    %v116 = vpack.c.bf16 %v104, %v103
    %v117 = vpack.c.bf16 %v106, %v105
    %v118 = vpack.c.bf16 %v108, %v107
    %v119 = vpack.c.bf16 %v110, %v109
    %v120 = vpack.c.bf16 %v112, %v111
    %v122 = vlaneseq
    %v123 = vshrl.u32 %v122, 7
    %v124 = vsub.s32 0, %v123
    %v125 = vrot.slane %v95, %v124
    %v143 = vunpack.c.l.b16 %v63
    %v144 = vunpack.c.l.b16 %v64
    %v145 = vunpack.c.l.b16 %v65
    %v146 = vunpack.c.l.b16 %v66
    %v147 = vunpack.c.l.b16 %v67
    %v148 = vunpack.c.l.b16 %v68
    %v149 = vunpack.c.l.b16 %v69
    %v150 = vunpack.c.l.b16 %v70
    %v151 = vunpack.c.l.b16 %v71
    %v152 = vunpack.c.l.b16 %v72
    %v153 = vunpack.c.l.b16 %v73
    %v154 = vunpack.c.l.b16 %v74
    %v155 = vunpack.c.l.b16 %v75
    %v156 = vunpack.c.l.b16 %v76
    %v157 = vunpack.c.l.b16 %v77
    %v158 = vunpack.c.l.b16 %v78
    %v159 = vpack.c.b16 %v144, %v143
    %v160 = vpack.c.b16 %v146, %v145
    %v161 = vpack.c.b16 %v148, %v147
    %v162 = vpack.c.b16 %v150, %v149
    %v163 = vpack.c.b16 %v152, %v151
    %v164 = vpack.c.b16 %v154, %v153
    %v165 = vpack.c.b16 %v156, %v155
    %v166 = vpack.c.b16 %v158, %v157
    %175 = vmatprep.subr.bf16.mxu0 0
    %176 = vmatpush1.bf16.msra.mxu0 %v166
    %177 = vmatprep.subr.bf16.mxu0 0
    %178 = vmatpush1.bf16.msra.mxu0 %v165
    %179 = vmatprep.subr.bf16.mxu0 0
    %180 = vmatpush1.bf16.msra.mxu0 %v164
    %181 = vmatprep.subr.bf16.mxu0 0
    %182 = vmatpush1.bf16.msra.mxu0 %v163
    %183 = vmatprep.subr.bf16.mxu0 0
    %184 = vmatpush1.bf16.msra.mxu0 %v162
    %185 = vmatprep.subr.bf16.mxu0 0
    %186 = vmatpush1.bf16.msra.mxu0 %v161
    %187 = vmatprep.subr.bf16.mxu0 0
    %188 = vmatpush1.bf16.msra.mxu0 %v160
    %189 = vmatprep.subr.bf16.mxu0 0
    %190 = vmatpush1.bf16.msra.mxu0 %v159
    %191 = vmatprep.subr.bf16.mxu0 0
    %192 = vmatpush2.bf16.msra.mxu0 0
    %193 = vmatprep.subr.bf16.mxu0 0
    %194 = vmatpush2.bf16.msra.mxu0 0
    %195 = vmatprep.subr.bf16.mxu0 0
    %196 = vmatpush2.bf16.msra.mxu0 0
    %197 = vmatprep.subr.bf16.mxu0 0
    %198 = vmatpush2.bf16.msra.mxu0 0
    %199 = vmatprep.subr.bf16.mxu0 0
    %200 = vmatpush2.bf16.msra.mxu0 0
    %201 = vmatprep.subr.bf16.mxu0 0
    %202 = vmatpush2.bf16.msra.mxu0 0
    %203 = vmatprep.subr.bf16.mxu0 0
    %204 = vmatpush2.bf16.msra.mxu0 0
    %205 = vmatprep.subr.bf16.mxu0 0
    %206 = vmatpush2.bf16.msra.mxu0 0
    %207 = vmatprep.mubr.bf16.mxu0 0
    %208 = vmatmul.mubr.bf16.gmra.mxu0 %v113
    %v209 = vpop.f32.mrf.mxu0
    %v210 = vadd.f32 %v125, %v209
    %v211 = vpop.f32.mrf.mxu0
    %v212 = vpop.f32.mrf.mxu0
    %v213 = vadd.f32 %v125, %v212
    %v214 = vpop.f32.mrf.mxu0
    %215 = vmatprep.mubr.bf16.mxu0 0
    %216 = vmatmul.mubr.bf16.gmra.mxu0 %v114
    %v217 = vpop.f32.mrf.mxu0
    %v218 = vadd.f32 %v125, %v217
    %v219 = vpop.f32.mrf.mxu0
    %v220 = vpop.f32.mrf.mxu0
    %v221 = vadd.f32 %v125, %v220
    %v222 = vpop.f32.mrf.mxu0
    %223 = vmatprep.mubr.bf16.mxu0 0
    %224 = vmatmul.mubr.bf16.gmra.mxu0 %v115
    %v225 = vpop.f32.mrf.mxu0
    %v226 = vadd.f32 %v125, %v225
    %v227 = vpop.f32.mrf.mxu0
    %v228 = vpop.f32.mrf.mxu0
    %v229 = vadd.f32 %v125, %v228
    %v230 = vpop.f32.mrf.mxu0
    %231 = vmatprep.mubr.bf16.mxu0 0
    %232 = vmatmul.mubr.bf16.gmra.mxu0 %v116
    %v233 = vpop.f32.mrf.mxu0
    %v234 = vadd.f32 %v125, %v233
    %v235 = vpop.f32.mrf.mxu0
    %v236 = vpop.f32.mrf.mxu0
    %v237 = vadd.f32 %v125, %v236
    %v238 = vpop.f32.mrf.mxu0
    %239 = vmatprep.mubr.bf16.mxu0 0
    %240 = vmatmul.mubr.bf16.gmra.mxu0 %v117
    %v241 = vpop.f32.mrf.mxu0
    %v242 = vadd.f32 %v125, %v241
    %v243 = vpop.f32.mrf.mxu0
    %v244 = vpop.f32.mrf.mxu0
    %v245 = vadd.f32 %v125, %v244
    %v246 = vpop.f32.mrf.mxu0
    %247 = vmatprep.mubr.bf16.mxu0 0
    %248 = vmatmul.mubr.bf16.gmra.mxu0 %v118
    %v249 = vpop.f32.mrf.mxu0
    %v250 = vadd.f32 %v125, %v249
    %v251 = vpop.f32.mrf.mxu0
    %v252 = vpop.f32.mrf.mxu0
    %v253 = vadd.f32 %v125, %v252
    %v254 = vpop.f32.mrf.mxu0
    %255 = vmatprep.mubr.bf16.mxu0 0
    %256 = vmatmul.mubr.bf16.gmra.mxu0 %v119
    %v257 = vpop.f32.mrf.mxu0
    %v258 = vadd.f32 %v125, %v257
    %v259 = vpop.f32.mrf.mxu0
    %v260 = vpop.f32.mrf.mxu0
    %v261 = vadd.f32 %v125, %v260
    %v262 = vpop.f32.mrf.mxu0
    %263 = vmatprep.mubr.bf16.mxu0 0
    %264 = vmatmul.mubr.bf16.gmra.mxu0 %v120
    %v265 = vpop.f32.mrf.mxu0
    %v266 = vadd.f32 %v125, %v265
    %v267 = vpop.f32.mrf.mxu0
    %v268 = vpop.f32.mrf.mxu0
    %v269 = vadd.f32 %v125, %v268
    %v270 = vpop.f32.mrf.mxu0
    %271 = vdwg.mxu0
    %v272 = vmul.f32 %v210, 0.5
    %v273 = vmul.f32 %v213, 0.5
    %v274 = vmul.f32 %v218, 0.5
    %v275 = vmul.f32 %v221, 0.5
    %v276 = vmul.f32 %v226, 0.5
    %v277 = vmul.f32 %v229, 0.5
    %v278 = vmul.f32 %v234, 0.5
    %v279 = vmul.f32 %v237, 0.5
    %v280 = vmul.f32 %v242, 0.5
    %v281 = vmul.f32 %v245, 0.5
    %v282 = vmul.f32 %v250, 0.5
    %v283 = vmul.f32 %v253, 0.5
    %v284 = vmul.f32 %v258, 0.5
    %v285 = vmul.f32 %v261, 0.5
    %v286 = vmul.f32 %v266, 0.5
    %v287 = vmul.f32 %v269, 0.5
    %v288 = vmul.f32 %v210, 0.70710677
    %v289 = vmul.f32 %v213, 0.70710677
    %v290 = vmul.f32 %v218, 0.70710677
    %v291 = vmul.f32 %v221, 0.70710677
    %v292 = vmul.f32 %v226, 0.70710677
    %v293 = vmul.f32 %v229, 0.70710677
    %v294 = vmul.f32 %v234, 0.70710677
    %v295 = vmul.f32 %v237, 0.70710677
    %v296 = vmul.f32 %v242, 0.70710677
    %v297 = vmul.f32 %v245, 0.70710677
    %v298 = vmul.f32 %v250, 0.70710677
    %v299 = vmul.f32 %v253, 0.70710677
    %v300 = vmul.f32 %v258, 0.70710677
    %v301 = vmul.f32 %v261, 0.70710677
    %v302 = vmul.f32 %v266, 0.70710677
    %v303 = vmul.f32 %v269, 0.70710677
    %v304 = verf.f32.pop %v288
    %v305 = verf.f32.pop %v289
    %v306 = verf.f32.pop %v290
    %v307 = verf.f32.pop %v291
    %v308 = verf.f32.pop %v292
    %v309 = verf.f32.pop %v293
    %v310 = verf.f32.pop %v294
    %v311 = verf.f32.pop %v295
    %v312 = verf.f32.pop %v296
    %v313 = verf.f32.pop %v297
    %v314 = verf.f32.pop %v298
    %v315 = verf.f32.pop %v299
    %v316 = verf.f32.pop %v300
    %v317 = verf.f32.pop %v301
    %v318 = verf.f32.pop %v302
    %v319 = verf.f32.pop %v303
    %v320 = vadd.f32 %v304, 1.0
    %v321 = vadd.f32 %v305, 1.0
    %v322 = vadd.f32 %v306, 1.0
    %v323 = vadd.f32 %v307, 1.0
    %v324 = vadd.f32 %v308, 1.0
    %v325 = vadd.f32 %v309, 1.0
    %v326 = vadd.f32 %v310, 1.0
    %v327 = vadd.f32 %v311, 1.0
    %v328 = vadd.f32 %v312, 1.0
    %v329 = vadd.f32 %v313, 1.0
    %v330 = vadd.f32 %v314, 1.0
    %v331 = vadd.f32 %v315, 1.0
    %v332 = vadd.f32 %v316, 1.0
    %v333 = vadd.f32 %v317, 1.0
    %v334 = vadd.f32 %v318, 1.0
    %v335 = vadd.f32 %v319, 1.0
    %v336 = vmul.f32 %v272, %v320
    %v337 = vmul.f32 %v273, %v321
    %v338 = vmul.f32 %v274, %v322
    %v339 = vmul.f32 %v275, %v323
    %v340 = vmul.f32 %v276, %v324
    %v341 = vmul.f32 %v277, %v325
    %v342 = vmul.f32 %v278, %v326
    %v343 = vmul.f32 %v279, %v327
    %v344 = vmul.f32 %v280, %v328
    %v345 = vmul.f32 %v281, %v329
    %v346 = vmul.f32 %v282, %v330
    %v347 = vmul.f32 %v283, %v331
    %v348 = vmul.f32 %v284, %v332
    %v349 = vmul.f32 %v285, %v333
    %v350 = vmul.f32 %v286, %v334
    %v351 = vmul.f32 %v287, %v335
    %v352 = vpack.c.bf16 %v337, %v336
    %v353 = vpack.c.bf16 %v339, %v338
    %v354 = vpack.c.bf16 %v341, %v340
    %v355 = vpack.c.bf16 %v343, %v342
    %v356 = vpack.c.bf16 %v345, %v344
    %v357 = vpack.c.bf16 %v347, %v346
    %v358 = vpack.c.bf16 %v349, %v348
    %v359 = vpack.c.bf16 %v351, %v350
    %360 = vmatprep.subr.bf16.mxu0 0
    %361 = vmatpush1.bf16.msra.mxu0 %v166
    %362 = vmatprep.subr.bf16.mxu0 0
    %363 = vmatpush1.bf16.msra.mxu0 %v165
    %364 = vmatprep.subr.bf16.mxu0 0
    %365 = vmatpush1.bf16.msra.mxu0 %v164
    %366 = vmatprep.subr.bf16.mxu0 0
    %367 = vmatpush1.bf16.msra.mxu0 %v163
    %368 = vmatprep.subr.bf16.mxu0 0
    %369 = vmatpush1.bf16.msra.mxu0 %v162
    %370 = vmatprep.subr.bf16.mxu0 0
    %371 = vmatpush1.bf16.msra.mxu0 %v161
    %372 = vmatprep.subr.bf16.mxu0 0
    %373 = vmatpush1.bf16.msra.mxu0 %v160
    %374 = vmatprep.subr.bf16.mxu0 0
    %375 = vmatpush1.bf16.msra.mxu0 %v159
    %376 = vmatprep.subr.bf16.mxu0 0
    %377 = vmatpush2.bf16.msra.mxu0 0
    %378 = vmatprep.subr.bf16.mxu0 0
    %379 = vmatpush2.bf16.msra.mxu0 0
    %380 = vmatprep.subr.bf16.mxu0 0
    %381 = vmatpush2.bf16.msra.mxu0 0
    %382 = vmatprep.subr.bf16.mxu0 0
    %383 = vmatpush2.bf16.msra.mxu0 0
    %384 = vmatprep.subr.bf16.mxu0 0
    %385 = vmatpush2.bf16.msra.mxu0 0
    %386 = vmatprep.subr.bf16.mxu0 0
    %387 = vmatpush2.bf16.msra.mxu0 0
    %388 = vmatprep.subr.bf16.mxu0 0
    %389 = vmatpush2.bf16.msra.mxu0 0
    %390 = vmatprep.subr.bf16.mxu0 0
    %391 = vmatpush2.bf16.msra.mxu0 0
    %392 = vmatprep.mubr.bf16.mxu0 0
    %393 = vmatmul.mubr.bf16.gmra.mxu0 %v352
    %v394 = vpop.f32.mrf.mxu0
    %v395 = vadd.f32 %v125, %v394
    %v396 = vpop.f32.mrf.mxu0
    %v397 = vpop.f32.mrf.mxu0
    %v398 = vadd.f32 %v125, %v397
    %v399 = vpop.f32.mrf.mxu0
    %400 = vmatprep.mubr.bf16.mxu0 0
    %401 = vmatmul.mubr.bf16.gmra.mxu0 %v353
    %v402 = vpop.f32.mrf.mxu0
    %v403 = vadd.f32 %v125, %v402
    %v404 = vpop.f32.mrf.mxu0
    %v405 = vpop.f32.mrf.mxu0
    %v406 = vadd.f32 %v125, %v405
    %v407 = vpop.f32.mrf.mxu0
    %408 = vmatprep.mubr.bf16.mxu0 0
    %409 = vmatmul.mubr.bf16.gmra.mxu0 %v354
    %v410 = vpop.f32.mrf.mxu0
    %v411 = vadd.f32 %v125, %v410
    %v412 = vpop.f32.mrf.mxu0
    %v413 = vpop.f32.mrf.mxu0
    %v414 = vadd.f32 %v125, %v413
    %v415 = vpop.f32.mrf.mxu0
    %416 = vmatprep.mubr.bf16.mxu0 0
    %417 = vmatmul.mubr.bf16.gmra.mxu0 %v355
    %v418 = vpop.f32.mrf.mxu0
    %v419 = vadd.f32 %v125, %v418
    %v420 = vpop.f32.mrf.mxu0
    %v421 = vpop.f32.mrf.mxu0
    %v422 = vadd.f32 %v125, %v421
    %v423 = vpop.f32.mrf.mxu0
    %424 = vmatprep.mubr.bf16.mxu0 0
    %425 = vmatmul.mubr.bf16.gmra.mxu0 %v356
    %v426 = vpop.f32.mrf.mxu0
    %v427 = vadd.f32 %v125, %v426
    %v428 = vpop.f32.mrf.mxu0
    %v429 = vpop.f32.mrf.mxu0
    %v430 = vadd.f32 %v125, %v429
    %v431 = vpop.f32.mrf.mxu0
    %432 = vmatprep.mubr.bf16.mxu0 0
    %433 = vmatmul.mubr.bf16.gmra.mxu0 %v357
    %v434 = vpop.f32.mrf.mxu0
    %v435 = vadd.f32 %v125, %v434
    %v436 = vpop.f32.mrf.mxu0
    %v437 = vpop.f32.mrf.mxu0
    %v438 = vadd.f32 %v125, %v437
    %v439 = vpop.f32.mrf.mxu0
    %440 = vmatprep.mubr.bf16.mxu0 0
    %441 = vmatmul.mubr.bf16.gmra.mxu0 %v358
    %v442 = vpop.f32.mrf.mxu0
    %v443 = vadd.f32 %v125, %v442
    %v444 = vpop.f32.mrf.mxu0
    %v445 = vpop.f32.mrf.mxu0
    %v446 = vadd.f32 %v125, %v445
    %v447 = vpop.f32.mrf.mxu0
    %448 = vmatprep.mubr.bf16.mxu0 0
    %449 = vmatmul.mubr.bf16.gmra.mxu0 %v359
    %v450 = vpop.f32.mrf.mxu0
    %v451 = vadd.f32 %v125, %v450
    %v452 = vpop.f32.mrf.mxu0
    %v453 = vpop.f32.mrf.mxu0
    %v454 = vadd.f32 %v125, %v453
    %v455 = vpop.f32.mrf.mxu0
    %456 = vdwg.mxu0
    %v457 = vmul.f32 %v395, 0.5
    %v458 = vmul.f32 %v398, 0.5
    %v459 = vmul.f32 %v403, 0.5
    %v460 = vmul.f32 %v406, 0.5
    %v461 = vmul.f32 %v411, 0.5
    %v462 = vmul.f32 %v414, 0.5
    %v463 = vmul.f32 %v419, 0.5
    %v464 = vmul.f32 %v422, 0.5
    %v465 = vmul.f32 %v427, 0.5
    %v466 = vmul.f32 %v430, 0.5
    %v467 = vmul.f32 %v435, 0.5
    %v468 = vmul.f32 %v438, 0.5
    %v469 = vmul.f32 %v443, 0.5
    %v470 = vmul.f32 %v446, 0.5
    %v471 = vmul.f32 %v451, 0.5
    %v472 = vmul.f32 %v454, 0.5
    %v473 = vmul.f32 %v395, 0.70710677
    %v474 = vmul.f32 %v398, 0.70710677
    %v475 = vmul.f32 %v403, 0.70710677
    %v476 = vmul.f32 %v406, 0.70710677
    %v477 = vmul.f32 %v411, 0.70710677
    %v478 = vmul.f32 %v414, 0.70710677
    %v479 = vmul.f32 %v419, 0.70710677
    %v480 = vmul.f32 %v422, 0.70710677
    %v481 = vmul.f32 %v427, 0.70710677
    %v482 = vmul.f32 %v430, 0.70710677
    %v483 = vmul.f32 %v435, 0.70710677
    %v484 = vmul.f32 %v438, 0.70710677
    %v485 = vmul.f32 %v443, 0.70710677
    %v486 = vmul.f32 %v446, 0.70710677
    %v487 = vmul.f32 %v451, 0.70710677
    %v488 = vmul.f32 %v454, 0.70710677
    %v489 = verf.f32.pop %v473
    %v490 = verf.f32.pop %v474
    %v491 = verf.f32.pop %v475
    %v492 = verf.f32.pop %v476
    %v493 = verf.f32.pop %v477
    %v494 = verf.f32.pop %v478
    %v495 = verf.f32.pop %v479
    %v496 = verf.f32.pop %v480
    %v497 = verf.f32.pop %v481
    %v498 = verf.f32.pop %v482
    %v499 = verf.f32.pop %v483
    %v500 = verf.f32.pop %v484
    %v501 = verf.f32.pop %v485
    %v502 = verf.f32.pop %v486
    %v503 = verf.f32.pop %v487
    %v504 = verf.f32.pop %v488
    %v505 = vadd.f32 %v489, 1.0
    %v506 = vadd.f32 %v490, 1.0
    %v507 = vadd.f32 %v491, 1.0
    %v508 = vadd.f32 %v492, 1.0
    %v509 = vadd.f32 %v493, 1.0
    %v510 = vadd.f32 %v494, 1.0
    %v511 = vadd.f32 %v495, 1.0
    %v512 = vadd.f32 %v496, 1.0
    %v513 = vadd.f32 %v497, 1.0
    %v514 = vadd.f32 %v498, 1.0
    %v515 = vadd.f32 %v499, 1.0
    %v516 = vadd.f32 %v500, 1.0
    %v517 = vadd.f32 %v501, 1.0
    %v518 = vadd.f32 %v502, 1.0
    %v519 = vadd.f32 %v503, 1.0
    %v520 = vadd.f32 %v504, 1.0
    %v521 = vmul.f32 %v457, %v505
    %v522 = vmul.f32 %v458, %v506
    %v523 = vmul.f32 %v459, %v507
    %v524 = vmul.f32 %v460, %v508
    %v525 = vmul.f32 %v461, %v509
    %v526 = vmul.f32 %v462, %v510
    %v527 = vmul.f32 %v463, %v511
    %v528 = vmul.f32 %v464, %v512
    %v529 = vmul.f32 %v465, %v513
    %v530 = vmul.f32 %v466, %v514
    %v531 = vmul.f32 %v467, %v515
    %v532 = vmul.f32 %v468, %v516
    %v533 = vmul.f32 %v469, %v517
    %v534 = vmul.f32 %v470, %v518
    %v535 = vmul.f32 %v471, %v519
    %v536 = vmul.f32 %v472, %v520
    %v537 = vpack.c.bf16 %v522, %v521
    %v538 = vpack.c.bf16 %v524, %v523
    %v539 = vpack.c.bf16 %v526, %v525
    %v540 = vpack.c.bf16 %v528, %v527
    %v541 = vpack.c.bf16 %v530, %v529
    %v542 = vpack.c.bf16 %v532, %v531
    %v543 = vpack.c.bf16 %v534, %v533
    %v544 = vpack.c.bf16 %v536, %v535
    %v546 = vlaneseq
    %v547 = vshrl.u32 %v546, 7
    %v548 = vsub.s32 0, %v547
    %v549 = vrot.slane %v96, %v548
    %v567 = vunpack.c.l.b16 %v79
    %v568 = vunpack.c.l.b16 %v80
    %v569 = vunpack.c.l.b16 %v81
    %v570 = vunpack.c.l.b16 %v82
    %v571 = vunpack.c.l.b16 %v83
    %v572 = vunpack.c.l.b16 %v84
    %v573 = vunpack.c.l.b16 %v85
    %v574 = vunpack.c.l.b16 %v86
    %v575 = vunpack.c.l.b16 %v87
    %v576 = vunpack.c.l.b16 %v88
    %v577 = vunpack.c.l.b16 %v89
    %v578 = vunpack.c.l.b16 %v90
    %v579 = vunpack.c.l.b16 %v91
    %v580 = vunpack.c.l.b16 %v92
    %v581 = vunpack.c.l.b16 %v93
    %v582 = vunpack.c.l.b16 %v94
    %v583 = vpack.c.b16 %v568, %v567
    %v584 = vpack.c.b16 %v570, %v569
    %v585 = vpack.c.b16 %v572, %v571
    %v586 = vpack.c.b16 %v574, %v573
    %v587 = vpack.c.b16 %v576, %v575
    %v588 = vpack.c.b16 %v578, %v577
    %v589 = vpack.c.b16 %v580, %v579
    %v590 = vpack.c.b16 %v582, %v581
    %599 = vmatprep.subr.bf16.mxu0 0
    %600 = vmatpush1.bf16.msra.mxu0 %v590
    %601 = vmatprep.subr.bf16.mxu0 0
    %602 = vmatpush1.bf16.msra.mxu0 %v589
    %603 = vmatprep.subr.bf16.mxu0 0
    %604 = vmatpush1.bf16.msra.mxu0 %v588
    %605 = vmatprep.subr.bf16.mxu0 0
    %606 = vmatpush1.bf16.msra.mxu0 %v587
    %607 = vmatprep.subr.bf16.mxu0 0
    %608 = vmatpush1.bf16.msra.mxu0 %v586
    %609 = vmatprep.subr.bf16.mxu0 0
    %610 = vmatpush1.bf16.msra.mxu0 %v585
    %611 = vmatprep.subr.bf16.mxu0 0
    %612 = vmatpush1.bf16.msra.mxu0 %v584
    %613 = vmatprep.subr.bf16.mxu0 0
    %614 = vmatpush1.bf16.msra.mxu0 %v583
    %615 = vmatprep.subr.bf16.mxu0 0
    %616 = vmatpush2.bf16.msra.mxu0 0
    %617 = vmatprep.subr.bf16.mxu0 0
    %618 = vmatpush2.bf16.msra.mxu0 0
    %619 = vmatprep.subr.bf16.mxu0 0
    %620 = vmatpush2.bf16.msra.mxu0 0
    %621 = vmatprep.subr.bf16.mxu0 0
    %622 = vmatpush2.bf16.msra.mxu0 0
    %623 = vmatprep.subr.bf16.mxu0 0
    %624 = vmatpush2.bf16.msra.mxu0 0
    %625 = vmatprep.subr.bf16.mxu0 0
    %626 = vmatpush2.bf16.msra.mxu0 0
    %627 = vmatprep.subr.bf16.mxu0 0
    %628 = vmatpush2.bf16.msra.mxu0 0
    %629 = vmatprep.subr.bf16.mxu0 0
    %630 = vmatpush2.bf16.msra.mxu0 0
    %631 = vmatprep.mubr.bf16.mxu0 0
    %632 = vmatmul.mubr.bf16.gmra.mxu0 %v537
    %v633 = vpop.f32.mrf.mxu0
    %v634 = vadd.f32 %v549, %v633
    %v635 = vpop.f32.mrf.mxu0
    %v636 = vpop.f32.mrf.mxu0
    %v637 = vadd.f32 %v549, %v636
    %v638 = vpop.f32.mrf.mxu0
    %639 = vmatprep.mubr.bf16.mxu0 0
    %640 = vmatmul.mubr.bf16.gmra.mxu0 %v538
    %v641 = vpop.f32.mrf.mxu0
    %v642 = vadd.f32 %v549, %v641
    %v643 = vpop.f32.mrf.mxu0
    %v644 = vpop.f32.mrf.mxu0
    %v645 = vadd.f32 %v549, %v644
    %v646 = vpop.f32.mrf.mxu0
    %647 = vmatprep.mubr.bf16.mxu0 0
    %648 = vmatmul.mubr.bf16.gmra.mxu0 %v539
    %v649 = vpop.f32.mrf.mxu0
    %v650 = vadd.f32 %v549, %v649
    %v651 = vpop.f32.mrf.mxu0
    %v652 = vpop.f32.mrf.mxu0
    %v653 = vadd.f32 %v549, %v652
    %v654 = vpop.f32.mrf.mxu0
    %655 = vmatprep.mubr.bf16.mxu0 0
    %656 = vmatmul.mubr.bf16.gmra.mxu0 %v540
    %v657 = vpop.f32.mrf.mxu0
    %v658 = vadd.f32 %v549, %v657
    %v659 = vpop.f32.mrf.mxu0
    %v660 = vpop.f32.mrf.mxu0
    %v661 = vadd.f32 %v549, %v660
    %v662 = vpop.f32.mrf.mxu0
    %663 = vmatprep.mubr.bf16.mxu0 0
    %664 = vmatmul.mubr.bf16.gmra.mxu0 %v541
    %v665 = vpop.f32.mrf.mxu0
    %v666 = vadd.f32 %v549, %v665
    %v667 = vpop.f32.mrf.mxu0
    %v668 = vpop.f32.mrf.mxu0
    %v669 = vadd.f32 %v549, %v668
    %v670 = vpop.f32.mrf.mxu0
    %671 = vmatprep.mubr.bf16.mxu0 0
    %672 = vmatmul.mubr.bf16.gmra.mxu0 %v542
    %v673 = vpop.f32.mrf.mxu0
    %v674 = vadd.f32 %v549, %v673
    %v675 = vpop.f32.mrf.mxu0
    %v676 = vpop.f32.mrf.mxu0
    %v677 = vadd.f32 %v549, %v676
    %v678 = vpop.f32.mrf.mxu0
    %679 = vmatprep.mubr.bf16.mxu0 0
    %680 = vmatmul.mubr.bf16.gmra.mxu0 %v543
    %v681 = vpop.f32.mrf.mxu0
    %v682 = vadd.f32 %v549, %v681
    %v683 = vpop.f32.mrf.mxu0
    %v684 = vpop.f32.mrf.mxu0
    %v685 = vadd.f32 %v549, %v684
    %v686 = vpop.f32.mrf.mxu0
    %687 = vmatprep.mubr.bf16.mxu0 0
    %688 = vmatmul.mubr.bf16.gmra.mxu0 %v544
    %v689 = vpop.f32.mrf.mxu0
    %v690 = vadd.f32 %v549, %v689
    %v691 = vpop.f32.mrf.mxu0
    %v692 = vpop.f32.mrf.mxu0
    %v693 = vadd.f32 %v549, %v692
    %v694 = vpop.f32.mrf.mxu0
    %695 = vdwg.mxu0
    %696 = vst [vmem:[#allocation8] sm:$0xff] %v634
    %697 = vst [vmem:[#allocation8 + $0x8] sm:$0xff] %v637
    %698 = vst [vmem:[#allocation8 + $0x10] sm:$0xff] %v642
    %699 = vst [vmem:[#allocation8 + $0x18] sm:$0xff] %v645
    %700 = vst [vmem:[#allocation8 + $0x20] sm:$0xff] %v650
    %701 = vst [vmem:[#allocation8 + $0x28] sm:$0xff] %v653
    %702 = vst [vmem:[#allocation8 + $0x30] sm:$0xff] %v658
    %703 = vst [vmem:[#allocation8 + $0x38] sm:$0xff] %v661
    %704 = vst [vmem:[#allocation8 + $0x40] sm:$0xff] %v666
    %705 = vst [vmem:[#allocation8 + $0x48] sm:$0xff] %v669
    %706 = vst [vmem:[#allocation8 + $0x50] sm:$0xff] %v674
    %707 = vst [vmem:[#allocation8 + $0x58] sm:$0xff] %v677
    %708 = vst [vmem:[#allocation8 + $0x60] sm:$0xff] %v682
    %709 = vst [vmem:[#allocation8 + $0x68] sm:$0xff] %v685
    %710 = vst [vmem:[#allocation8 + $0x70] sm:$0xff] %v690
    %711 = vst [vmem:[#allocation8 + $0x78] sm:$0xff] %v693
    %v712 = vld [vmem:[#allocation2 + $0x80] sm:$0xff]
    %v713 = vld [vmem:[#allocation2 + $0x88] sm:$0xff]
    %v714 = vld [vmem:[#allocation2 + $0x90] sm:$0xff]
    %v715 = vld [vmem:[#allocation2 + $0x98] sm:$0xff]
    %v716 = vld [vmem:[#allocation2 + $0xa0] sm:$0xff]
    %v717 = vld [vmem:[#allocation2 + $0xa8] sm:$0xff]
    %v718 = vld [vmem:[#allocation2 + $0xb0] sm:$0xff]
    %v719 = vld [vmem:[#allocation2 + $0xb8] sm:$0xff]
    %v720 = vld [vmem:[#allocation2 + $0xc0] sm:$0xff]
    %v721 = vld [vmem:[#allocation2 + $0xc8] sm:$0xff]
    %v722 = vld [vmem:[#allocation2 + $0xd0] sm:$0xff]
    %v723 = vld [vmem:[#allocation2 + $0xd8] sm:$0xff]
    %v724 = vld [vmem:[#allocation2 + $0xe0] sm:$0xff]
    %v725 = vld [vmem:[#allocation2 + $0xe8] sm:$0xff]
    %v726 = vld [vmem:[#allocation2 + $0xf0] sm:$0xff]
    %v727 = vld [vmem:[#allocation2 + $0xf8] sm:$0xff]
    %v728 = vpack.c.bf16 %v713, %v712
    %v729 = vpack.c.bf16 %v715, %v714
    %v730 = vpack.c.bf16 %v717, %v716
    %v731 = vpack.c.bf16 %v719, %v718
    %v732 = vpack.c.bf16 %v721, %v720
    %v733 = vpack.c.bf16 %v723, %v722
    %v734 = vpack.c.bf16 %v725, %v724
    %v735 = vpack.c.bf16 %v727, %v726
    %736 = vmatprep.subr.bf16.mxu0 0
    %737 = vmatpush1.bf16.msra.mxu0 %v166
    %738 = vmatprep.subr.bf16.mxu0 0
    %739 = vmatpush1.bf16.msra.mxu0 %v165
    %740 = vmatprep.subr.bf16.mxu0 0
    %741 = vmatpush1.bf16.msra.mxu0 %v164
    %742 = vmatprep.subr.bf16.mxu0 0
    %743 = vmatpush1.bf16.msra.mxu0 %v163
    %744 = vmatprep.subr.bf16.mxu0 0
    %745 = vmatpush1.bf16.msra.mxu0 %v162
    %746 = vmatprep.subr.bf16.mxu0 0
    %747 = vmatpush1.bf16.msra.mxu0 %v161
    %748 = vmatprep.subr.bf16.mxu0 0
    %749 = vmatpush1.bf16.msra.mxu0 %v160
    %750 = vmatprep.subr.bf16.mxu0 0
    %751 = vmatpush1.bf16.msra.mxu0 %v159
    %752 = vmatprep.subr.bf16.mxu0 0
    %753 = vmatpush2.bf16.msra.mxu0 0
    %754 = vmatprep.subr.bf16.mxu0 0
    %755 = vmatpush2.bf16.msra.mxu0 0
    %756 = vmatprep.subr.bf16.mxu0 0
    %757 = vmatpush2.bf16.msra.mxu0 0
    %758 = vmatprep.subr.bf16.mxu0 0
    %759 = vmatpush2.bf16.msra.mxu0 0
    %760 = vmatprep.subr.bf16.mxu0 0
    %761 = vmatpush2.bf16.msra.mxu0 0
    %762 = vmatprep.subr.bf16.mxu0 0
    %763 = vmatpush2.bf16.msra.mxu0 0
    %764 = vmatprep.subr.bf16.mxu0 0
    %765 = vmatpush2.bf16.msra.mxu0 0
    %766 = vmatprep.subr.bf16.mxu0 0
    %767 = vmatpush2.bf16.msra.mxu0 0
    %768 = vmatprep.mubr.bf16.mxu0 0
    %769 = vmatmul.mubr.bf16.gmra.mxu0 %v728
    %v770 = vpop.f32.mrf.mxu0
    %v771 = vadd.f32 %v125, %v770
    %v772 = vpop.f32.mrf.mxu0
    %v773 = vpop.f32.mrf.mxu0
    %v774 = vadd.f32 %v125, %v773
    %v775 = vpop.f32.mrf.mxu0
    %776 = vmatprep.mubr.bf16.mxu0 0
    %777 = vmatmul.mubr.bf16.gmra.mxu0 %v729
    %v778 = vpop.f32.mrf.mxu0
    %v779 = vadd.f32 %v125, %v778
    %v780 = vpop.f32.mrf.mxu0
    %v781 = vpop.f32.mrf.mxu0
    %v782 = vadd.f32 %v125, %v781
    %v783 = vpop.f32.mrf.mxu0
    %784 = vmatprep.mubr.bf16.mxu0 0
    %785 = vmatmul.mubr.bf16.gmra.mxu0 %v730
    %v786 = vpop.f32.mrf.mxu0
    %v787 = vadd.f32 %v125, %v786
    %v788 = vpop.f32.mrf.mxu0
    %v789 = vpop.f32.mrf.mxu0
    %v790 = vadd.f32 %v125, %v789
    %v791 = vpop.f32.mrf.mxu0
    %792 = vmatprep.mubr.bf16.mxu0 0
    %793 = vmatmul.mubr.bf16.gmra.mxu0 %v731
    %v794 = vpop.f32.mrf.mxu0
    %v795 = vadd.f32 %v125, %v794
    %v796 = vpop.f32.mrf.mxu0
    %v797 = vpop.f32.mrf.mxu0
    %v798 = vadd.f32 %v125, %v797
    %v799 = vpop.f32.mrf.mxu0
    %800 = vmatprep.mubr.bf16.mxu0 0
    %801 = vmatmul.mubr.bf16.gmra.mxu0 %v732
    %v802 = vpop.f32.mrf.mxu0
    %v803 = vadd.f32 %v125, %v802
    %v804 = vpop.f32.mrf.mxu0
    %v805 = vpop.f32.mrf.mxu0
    %v806 = vadd.f32 %v125, %v805
    %v807 = vpop.f32.mrf.mxu0
    %808 = vmatprep.mubr.bf16.mxu0 0
    %809 = vmatmul.mubr.bf16.gmra.mxu0 %v733
    %v810 = vpop.f32.mrf.mxu0
    %v811 = vadd.f32 %v125, %v810
    %v812 = vpop.f32.mrf.mxu0
    %v813 = vpop.f32.mrf.mxu0
    %v814 = vadd.f32 %v125, %v813
    %v815 = vpop.f32.mrf.mxu0
    %816 = vmatprep.mubr.bf16.mxu0 0
    %817 = vmatmul.mubr.bf16.gmra.mxu0 %v734
    %v818 = vpop.f32.mrf.mxu0
    %v819 = vadd.f32 %v125, %v818
    %v820 = vpop.f32.mrf.mxu0
    %v821 = vpop.f32.mrf.mxu0
    %v822 = vadd.f32 %v125, %v821
    %v823 = vpop.f32.mrf.mxu0
    %824 = vmatprep.mubr.bf16.mxu0 0
    %825 = vmatmul.mubr.bf16.gmra.mxu0 %v735
    %v826 = vpop.f32.mrf.mxu0
    %v827 = vadd.f32 %v125, %v826
    %v828 = vpop.f32.mrf.mxu0
    %v829 = vpop.f32.mrf.mxu0
    %v830 = vadd.f32 %v125, %v829
    %v831 = vpop.f32.mrf.mxu0
    %832 = vdwg.mxu0
    %v833 = vmul.f32 %v771, 0.5
    %v834 = vmul.f32 %v774, 0.5
    %v835 = vmul.f32 %v779, 0.5
    %v836 = vmul.f32 %v782, 0.5
    %v837 = vmul.f32 %v787, 0.5
    %v838 = vmul.f32 %v790, 0.5
    %v839 = vmul.f32 %v795, 0.5
    %v840 = vmul.f32 %v798, 0.5
    %v841 = vmul.f32 %v803, 0.5
    %v842 = vmul.f32 %v806, 0.5
    %v843 = vmul.f32 %v811, 0.5
    %v844 = vmul.f32 %v814, 0.5
    %v845 = vmul.f32 %v819, 0.5
    %v846 = vmul.f32 %v822, 0.5
    %v847 = vmul.f32 %v827, 0.5
    %v848 = vmul.f32 %v830, 0.5
    %v849 = vmul.f32 %v771, 0.70710677
    %v850 = vmul.f32 %v774, 0.70710677
    %v851 = vmul.f32 %v779, 0.70710677
    %v852 = vmul.f32 %v782, 0.70710677
    %v853 = vmul.f32 %v787, 0.70710677
    %v854 = vmul.f32 %v790, 0.70710677
    %v855 = vmul.f32 %v795, 0.70710677
    %v856 = vmul.f32 %v798, 0.70710677
    %v857 = vmul.f32 %v803, 0.70710677
    %v858 = vmul.f32 %v806, 0.70710677
    %v859 = vmul.f32 %v811, 0.70710677
    %v860 = vmul.f32 %v814, 0.70710677
    %v861 = vmul.f32 %v819, 0.70710677
    %v862 = vmul.f32 %v822, 0.70710677
    %v863 = vmul.f32 %v827, 0.70710677
    %v864 = vmul.f32 %v830, 0.70710677
    %v865 = verf.f32.pop %v849
    %v866 = verf.f32.pop %v850
    %v867 = verf.f32.pop %v851
    %v868 = verf.f32.pop %v852
    %v869 = verf.f32.pop %v853
    %v870 = verf.f32.pop %v854
    %v871 = verf.f32.pop %v855
    %v872 = verf.f32.pop %v856
    %v873 = verf.f32.pop %v857
    %v874 = verf.f32.pop %v858
    %v875 = verf.f32.pop %v859
    %v876 = verf.f32.pop %v860
    %v877 = verf.f32.pop %v861
    %v878 = verf.f32.pop %v862
    %v879 = verf.f32.pop %v863
    %v880 = verf.f32.pop %v864
    %v881 = vadd.f32 %v865, 1.0
    %v882 = vadd.f32 %v866, 1.0
    %v883 = vadd.f32 %v867, 1.0
    %v884 = vadd.f32 %v868, 1.0
    %v885 = vadd.f32 %v869, 1.0
    %v886 = vadd.f32 %v870, 1.0
    %v887 = vadd.f32 %v871, 1.0
    %v888 = vadd.f32 %v872, 1.0
    %v889 = vadd.f32 %v873, 1.0
    %v890 = vadd.f32 %v874, 1.0
    %v891 = vadd.f32 %v875, 1.0
    %v892 = vadd.f32 %v876, 1.0
    %v893 = vadd.f32 %v877, 1.0
    %v894 = vadd.f32 %v878, 1.0
    %v895 = vadd.f32 %v879, 1.0
    %v896 = vadd.f32 %v880, 1.0
    %v897 = vmul.f32 %v833, %v881
    %v898 = vmul.f32 %v834, %v882
    %v899 = vmul.f32 %v835, %v883
    %v900 = vmul.f32 %v836, %v884
    %v901 = vmul.f32 %v837, %v885
    %v902 = vmul.f32 %v838, %v886
    %v903 = vmul.f32 %v839, %v887
    %v904 = vmul.f32 %v840, %v888
    %v905 = vmul.f32 %v841, %v889
    %v906 = vmul.f32 %v842, %v890
    %v907 = vmul.f32 %v843, %v891
    %v908 = vmul.f32 %v844, %v892
    %v909 = vmul.f32 %v845, %v893
    %v910 = vmul.f32 %v846, %v894
    %v911 = vmul.f32 %v847, %v895
    %v912 = vmul.f32 %v848, %v896
    %v913 = vpack.c.bf16 %v898, %v897
    %v914 = vpack.c.bf16 %v900, %v899
    %v915 = vpack.c.bf16 %v902, %v901
    %v916 = vpack.c.bf16 %v904, %v903
    %v917 = vpack.c.bf16 %v906, %v905
    %v918 = vpack.c.bf16 %v908, %v907
    %v919 = vpack.c.bf16 %v910, %v909
    %v920 = vpack.c.bf16 %v912, %v911
    %921 = vmatprep.subr.bf16.mxu0 0
    %922 = vmatpush1.bf16.msra.mxu0 %v166
    %923 = vmatprep.subr.bf16.mxu0 0
    %924 = vmatpush1.bf16.msra.mxu0 %v165
    %925 = vmatprep.subr.bf16.mxu0 0
    %926 = vmatpush1.bf16.msra.mxu0 %v164
    %927 = vmatprep.subr.bf16.mxu0 0
    %928 = vmatpush1.bf16.msra.mxu0 %v163
    %929 = vmatprep.subr.bf16.mxu0 0
    %930 = vmatpush1.bf16.msra.mxu0 %v162
    %931 = vmatprep.subr.bf16.mxu0 0
    %932 = vmatpush1.bf16.msra.mxu0 %v161
    %933 = vmatprep.subr.bf16.mxu0 0
    %934 = vmatpush1.bf16.msra.mxu0 %v160
    %935 = vmatprep.subr.bf16.mxu0 0
    %936 = vmatpush1.bf16.msra.mxu0 %v159
    %937 = vmatprep.subr.bf16.mxu0 0
    %938 = vmatpush2.bf16.msra.mxu0 0
    %939 = vmatprep.subr.bf16.mxu0 0
    %940 = vmatpush2.bf16.msra.mxu0 0
    %941 = vmatprep.subr.bf16.mxu0 0
    %942 = vmatpush2.bf16.msra.mxu0 0
    %943 = vmatprep.subr.bf16.mxu0 0
    %944 = vmatpush2.bf16.msra.mxu0 0
    %945 = vmatprep.subr.bf16.mxu0 0
    %946 = vmatpush2.bf16.msra.mxu0 0
    %947 = vmatprep.subr.bf16.mxu0 0
    %948 = vmatpush2.bf16.msra.mxu0 0
    %949 = vmatprep.subr.bf16.mxu0 0
    %950 = vmatpush2.bf16.msra.mxu0 0
    %951 = vmatprep.subr.bf16.mxu0 0
    %952 = vmatpush2.bf16.msra.mxu0 0
    %953 = vmatprep.mubr.bf16.mxu0 0
    %954 = vmatmul.mubr.bf16.gmra.mxu0 %v913
    %v955 = vpop.f32.mrf.mxu0
    %v956 = vadd.f32 %v125, %v955
    %v957 = vpop.f32.mrf.mxu0
    %v958 = vpop.f32.mrf.mxu0
    %v959 = vadd.f32 %v125, %v958
    %v960 = vpop.f32.mrf.mxu0
    %961 = vmatprep.mubr.bf16.mxu0 0
    %962 = vmatmul.mubr.bf16.gmra.mxu0 %v914
    %v963 = vpop.f32.mrf.mxu0
    %v964 = vadd.f32 %v125, %v963
    %v965 = vpop.f32.mrf.mxu0
    %v966 = vpop.f32.mrf.mxu0
    %v967 = vadd.f32 %v125, %v966
    %v968 = vpop.f32.mrf.mxu0
    %969 = vmatprep.mubr.bf16.mxu0 0
    %970 = vmatmul.mubr.bf16.gmra.mxu0 %v915
    %v971 = vpop.f32.mrf.mxu0
    %v972 = vadd.f32 %v125, %v971
    %v973 = vpop.f32.mrf.mxu0
    %v974 = vpop.f32.mrf.mxu0
    %v975 = vadd.f32 %v125, %v974
    %v976 = vpop.f32.mrf.mxu0
    %977 = vmatprep.mubr.bf16.mxu0 0
    %978 = vmatmul.mubr.bf16.gmra.mxu0 %v916
    %v979 = vpop.f32.mrf.mxu0
    %v980 = vadd.f32 %v125, %v979
    %v981 = vpop.f32.mrf.mxu0
    %v982 = vpop.f32.mrf.mxu0
    %v983 = vadd.f32 %v125, %v982
    %v984 = vpop.f32.mrf.mxu0
    %985 = vmatprep.mubr.bf16.mxu0 0
    %986 = vmatmul.mubr.bf16.gmra.mxu0 %v917
    %v987 = vpop.f32.mrf.mxu0
    %v988 = vadd.f32 %v125, %v987
    %v989 = vpop.f32.mrf.mxu0
    %v990 = vpop.f32.mrf.mxu0
    %v991 = vadd.f32 %v125, %v990
    %v992 = vpop.f32.mrf.mxu0
    %993 = vmatprep.mubr.bf16.mxu0 0
    %994 = vmatmul.mubr.bf16.gmra.mxu0 %v918
    %v995 = vpop.f32.mrf.mxu0
    %v996 = vadd.f32 %v125, %v995
    %v997 = vpop.f32.mrf.mxu0
    %v998 = vpop.f32.mrf.mxu0
    %v999 = vadd.f32 %v125, %v998
    %v1000 = vpop.f32.mrf.mxu0
    %1001 = vmatprep.mubr.bf16.mxu0 0
    %1002 = vmatmul.mubr.bf16.gmra.mxu0 %v919
    %v1003 = vpop.f32.mrf.mxu0
    %v1004 = vadd.f32 %v125, %v1003
    %v1005 = vpop.f32.mrf.mxu0
    %v1006 = vpop.f32.mrf.mxu0
    %v1007 = vadd.f32 %v125, %v1006
    %v1008 = vpop.f32.mrf.mxu0
    %1009 = vmatprep.mubr.bf16.mxu0 0
    %1010 = vmatmul.mubr.bf16.gmra.mxu0 %v920
    %v1011 = vpop.f32.mrf.mxu0
    %v1012 = vadd.f32 %v125, %v1011
    %v1013 = vpop.f32.mrf.mxu0
    %v1014 = vpop.f32.mrf.mxu0
    %v1015 = vadd.f32 %v125, %v1014
    %v1016 = vpop.f32.mrf.mxu0
    %1017 = vdwg.mxu0
    %v1018 = vmul.f32 %v956, 0.5
    %v1019 = vmul.f32 %v959, 0.5
    %v1020 = vmul.f32 %v964, 0.5
    %v1021 = vmul.f32 %v967, 0.5
    %v1022 = vmul.f32 %v972, 0.5
    %v1023 = vmul.f32 %v975, 0.5
    %v1024 = vmul.f32 %v980, 0.5
    %v1025 = vmul.f32 %v983, 0.5
    %v1026 = vmul.f32 %v988, 0.5
    %v1027 = vmul.f32 %v991, 0.5
    %v1028 = vmul.f32 %v996, 0.5
    %v1029 = vmul.f32 %v999, 0.5
    %v1030 = vmul.f32 %v1004, 0.5
    %v1031 = vmul.f32 %v1007, 0.5
    %v1032 = vmul.f32 %v1012, 0.5
    %v1033 = vmul.f32 %v1015, 0.5
    %v1034 = vmul.f32 %v956, 0.70710677
    %v1035 = vmul.f32 %v959, 0.70710677
    %v1036 = vmul.f32 %v964, 0.70710677
    %v1037 = vmul.f32 %v967, 0.70710677
    %v1038 = vmul.f32 %v972, 0.70710677
    %v1039 = vmul.f32 %v975, 0.70710677
    %v1040 = vmul.f32 %v980, 0.70710677
    %v1041 = vmul.f32 %v983, 0.70710677
    %v1042 = vmul.f32 %v988, 0.70710677
    %v1043 = vmul.f32 %v991, 0.70710677
    %v1044 = vmul.f32 %v996, 0.70710677
    %v1045 = vmul.f32 %v999, 0.70710677
    %v1046 = vmul.f32 %v1004, 0.70710677
    %v1047 = vmul.f32 %v1007, 0.70710677
    %v1048 = vmul.f32 %v1012, 0.70710677
    %v1049 = vmul.f32 %v1015, 0.70710677
    %v1050 = verf.f32.pop %v1034
    %v1051 = verf.f32.pop %v1035
    %v1052 = verf.f32.pop %v1036
    %v1053 = verf.f32.pop %v1037
    %v1054 = verf.f32.pop %v1038
    %v1055 = verf.f32.pop %v1039
    %v1056 = verf.f32.pop %v1040
    %v1057 = verf.f32.pop %v1041
    %v1058 = verf.f32.pop %v1042
    %v1059 = verf.f32.pop %v1043
    %v1060 = verf.f32.pop %v1044
    %v1061 = verf.f32.pop %v1045
    %v1062 = verf.f32.pop %v1046
    %v1063 = verf.f32.pop %v1047
    %v1064 = verf.f32.pop %v1048
    %v1065 = verf.f32.pop %v1049
    %v1066 = vadd.f32 %v1050, 1.0
    %v1067 = vadd.f32 %v1051, 1.0
    %v1068 = vadd.f32 %v1052, 1.0
    %v1069 = vadd.f32 %v1053, 1.0
    %v1070 = vadd.f32 %v1054, 1.0
    %v1071 = vadd.f32 %v1055, 1.0
    %v1072 = vadd.f32 %v1056, 1.0
    %v1073 = vadd.f32 %v1057, 1.0
    %v1074 = vadd.f32 %v1058, 1.0
    %v1075 = vadd.f32 %v1059, 1.0
    %v1076 = vadd.f32 %v1060, 1.0
    %v1077 = vadd.f32 %v1061, 1.0
    %v1078 = vadd.f32 %v1062, 1.0
    %v1079 = vadd.f32 %v1063, 1.0
    %v1080 = vadd.f32 %v1064, 1.0
    %v1081 = vadd.f32 %v1065, 1.0
    %v1082 = vmul.f32 %v1018, %v1066
    %v1083 = vmul.f32 %v1019, %v1067
    %v1084 = vmul.f32 %v1020, %v1068
    %v1085 = vmul.f32 %v1021, %v1069
    %v1086 = vmul.f32 %v1022, %v1070
    %v1087 = vmul.f32 %v1023, %v1071
    %v1088 = vmul.f32 %v1024, %v1072
    %v1089 = vmul.f32 %v1025, %v1073
    %v1090 = vmul.f32 %v1026, %v1074
    %v1091 = vmul.f32 %v1027, %v1075
    %v1092 = vmul.f32 %v1028, %v1076
    %v1093 = vmul.f32 %v1029, %v1077
    %v1094 = vmul.f32 %v1030, %v1078
    %v1095 = vmul.f32 %v1031, %v1079
    %v1096 = vmul.f32 %v1032, %v1080
    %v1097 = vmul.f32 %v1033, %v1081
    %v1098 = vpack.c.bf16 %v1083, %v1082
    %v1099 = vpack.c.bf16 %v1085, %v1084
    %v1100 = vpack.c.bf16 %v1087, %v1086
    %v1101 = vpack.c.bf16 %v1089, %v1088
    %v1102 = vpack.c.bf16 %v1091, %v1090
    %v1103 = vpack.c.bf16 %v1093, %v1092
    %v1104 = vpack.c.bf16 %v1095, %v1094
    %v1105 = vpack.c.bf16 %v1097, %v1096
    %1106 = vmatprep.subr.bf16.mxu0 0
    %1107 = vmatpush1.bf16.msra.mxu0 %v590
    %1108 = vmatprep.subr.bf16.mxu0 0
    %1109 = vmatpush1.bf16.msra.mxu0 %v589
    %1110 = vmatprep.subr.bf16.mxu0 0
    %1111 = vmatpush1.bf16.msra.mxu0 %v588
    %1112 = vmatprep.subr.bf16.mxu0 0
    %1113 = vmatpush1.bf16.msra.mxu0 %v587
    %1114 = vmatprep.subr.bf16.mxu0 0
    %1115 = vmatpush1.bf16.msra.mxu0 %v586
    %1116 = vmatprep.subr.bf16.mxu0 0
    %1117 = vmatpush1.bf16.msra.mxu0 %v585
    %1118 = vmatprep.subr.bf16.mxu0 0
    %1119 = vmatpush1.bf16.msra.mxu0 %v584
    %1120 = vmatprep.subr.bf16.mxu0 0
    %1121 = vmatpush1.bf16.msra.mxu0 %v583
    %1122 = vmatprep.subr.bf16.mxu0 0
    %1123 = vmatpush2.bf16.msra.mxu0 0
    %1124 = vmatprep.subr.bf16.mxu0 0
    %1125 = vmatpush2.bf16.msra.mxu0 0
    %1126 = vmatprep.subr.bf16.mxu0 0
    %1127 = vmatpush2.bf16.msra.mxu0 0
    %1128 = vmatprep.subr.bf16.mxu0 0
    %1129 = vmatpush2.bf16.msra.mxu0 0
    %1130 = vmatprep.subr.bf16.mxu0 0
    %1131 = vmatpush2.bf16.msra.mxu0 0
    %1132 = vmatprep.subr.bf16.mxu0 0
    %1133 = vmatpush2.bf16.msra.mxu0 0
    %1134 = vmatprep.subr.bf16.mxu0 0
    %1135 = vmatpush2.bf16.msra.mxu0 0
    %1136 = vmatprep.subr.bf16.mxu0 0
    %1137 = vmatpush2.bf16.msra.mxu0 0
    %1138 = vmatprep.mubr.bf16.mxu0 0
    %1139 = vmatmul.mubr.bf16.gmra.mxu0 %v1098
    %v1140 = vpop.f32.mrf.mxu0
    %v1141 = vadd.f32 %v549, %v1140
    %v1142 = vpop.f32.mrf.mxu0
    %v1143 = vpop.f32.mrf.mxu0
    %v1144 = vadd.f32 %v549, %v1143
    %v1145 = vpop.f32.mrf.mxu0
    %1146 = vmatprep.mubr.bf16.mxu0 0
    %1147 = vmatmul.mubr.bf16.gmra.mxu0 %v1099
    %v1148 = vpop.f32.mrf.mxu0
    %v1149 = vadd.f32 %v549, %v1148
    %v1150 = vpop.f32.mrf.mxu0
    %v1151 = vpop.f32.mrf.mxu0
    %v1152 = vadd.f32 %v549, %v1151
    %v1153 = vpop.f32.mrf.mxu0
    %1154 = vmatprep.mubr.bf16.mxu0 0
    %1155 = vmatmul.mubr.bf16.gmra.mxu0 %v1100
    %v1156 = vpop.f32.mrf.mxu0
    %v1157 = vadd.f32 %v549, %v1156
    %v1158 = vpop.f32.mrf.mxu0
    %v1159 = vpop.f32.mrf.mxu0
    %v1160 = vadd.f32 %v549, %v1159
    %v1161 = vpop.f32.mrf.mxu0
    %1162 = vmatprep.mubr.bf16.mxu0 0
    %1163 = vmatmul.mubr.bf16.gmra.mxu0 %v1101
    %v1164 = vpop.f32.mrf.mxu0
    %v1165 = vadd.f32 %v549, %v1164
    %v1166 = vpop.f32.mrf.mxu0
    %v1167 = vpop.f32.mrf.mxu0
    %v1168 = vadd.f32 %v549, %v1167
    %v1169 = vpop.f32.mrf.mxu0
    %1170 = vmatprep.mubr.bf16.mxu0 0
    %1171 = vmatmul.mubr.bf16.gmra.mxu0 %v1102
    %v1172 = vpop.f32.mrf.mxu0
    %v1173 = vadd.f32 %v549, %v1172
    %v1174 = vpop.f32.mrf.mxu0
    %v1175 = vpop.f32.mrf.mxu0
    %v1176 = vadd.f32 %v549, %v1175
    %v1177 = vpop.f32.mrf.mxu0
    %1178 = vmatprep.mubr.bf16.mxu0 0
    %1179 = vmatmul.mubr.bf16.gmra.mxu0 %v1103
    %v1180 = vpop.f32.mrf.mxu0
    %v1181 = vadd.f32 %v549, %v1180
    %v1182 = vpop.f32.mrf.mxu0
    %v1183 = vpop.f32.mrf.mxu0
    %v1184 = vadd.f32 %v549, %v1183
    %v1185 = vpop.f32.mrf.mxu0
    %1186 = vmatprep.mubr.bf16.mxu0 0
    %1187 = vmatmul.mubr.bf16.gmra.mxu0 %v1104
    %v1188 = vpop.f32.mrf.mxu0
    %v1189 = vadd.f32 %v549, %v1188
    %v1190 = vpop.f32.mrf.mxu0
    %v1191 = vpop.f32.mrf.mxu0
    %v1192 = vadd.f32 %v549, %v1191
    %v1193 = vpop.f32.mrf.mxu0
    %1194 = vmatprep.mubr.bf16.mxu0 0
    %1195 = vmatmul.mubr.bf16.gmra.mxu0 %v1105
    %v1196 = vpop.f32.mrf.mxu0
    %v1197 = vadd.f32 %v549, %v1196
    %v1198 = vpop.f32.mrf.mxu0
    %v1199 = vpop.f32.mrf.mxu0
    %v1200 = vadd.f32 %v549, %v1199
    %v1201 = vpop.f32.mrf.mxu0
    %1202 = vdwg.mxu0
    %1203 = vst [vmem:[#allocation8 + $0x80] sm:$0xff] %v1141
    %1204 = vst [vmem:[#allocation8 + $0x88] sm:$0xff] %v1144
    %1205 = vst [vmem:[#allocation8 + $0x90] sm:$0xff] %v1149
    %1206 = vst [vmem:[#allocation8 + $0x98] sm:$0xff] %v1152
    %1207 = vst [vmem:[#allocation8 + $0xa0] sm:$0xff] %v1157
    %1208 = vst [vmem:[#allocation8 + $0xa8] sm:$0xff] %v1160
    %1209 = vst [vmem:[#allocation8 + $0xb0] sm:$0xff] %v1165
    %1210 = vst [vmem:[#allocation8 + $0xb8] sm:$0xff] %v1168
    %1211 = vst [vmem:[#allocation8 + $0xc0] sm:$0xff] %v1173
    %1212 = vst [vmem:[#allocation8 + $0xc8] sm:$0xff] %v1176
    %1213 = vst [vmem:[#allocation8 + $0xd0] sm:$0xff] %v1181
    %1214 = vst [vmem:[#allocation8 + $0xd8] sm:$0xff] %v1184
    %1215 = vst [vmem:[#allocation8 + $0xe0] sm:$0xff] %v1189
    %1216 = vst [vmem:[#allocation8 + $0xe8] sm:$0xff] %v1192
    %1217 = vst [vmem:[#allocation8 + $0xf0] sm:$0xff] %v1197
    %1218 = vst [vmem:[#allocation8 + $0xf8] sm:$0xff] %v1200
    // Predicated region
    $region34: #{tpu_custom_call.1} parent=1 // pred_check
      _
    $region35: #{tpu_custom_call.1} parent=1 // pred_check_branch
      %1220 = sbr.rel (0) target = $region37
    $region36: #{tpu_custom_call.1} parent=1 // pred_region
      %s1222 = ssub.s32 4096, 4096
      %1223 = vsyncadd [#allocation4], %s1222
      %s1224 = sshll.u32 [#allocation8], 4
      %s1225 = int_to_ptr.vmem [resolvable:$true] %s1224
      %1230 = dma.vmem_to_hbm [thread:$0]  %s1225, 4096, %s5, [#allocation4], 128, 128, 8
    $region37: #{tpu_custom_call.1} parent=1 // pred_fallthru
      _
    // Predicated region
    $region38: #{tpu_custom_call.1} parent=1 // pred_check
      _
    $region39: #{tpu_custom_call.1} parent=1 // pred_check_branch
      %1232 = sbr.rel (0) target = $region41
    $region40: #{tpu_custom_call.1} parent=1 // pred_region
      %1233 = dma.done [#allocation4], 4096
    $region41: #{tpu_custom_call.1} parent=1 // pred_fallthru
      _
    %1234 = vsyncpa [#allocation3], 1
    %1235 = vsyncpa [#allocation6], 1
    %1236 = vsyncpa [#allocation4], 1

// kernel: tpu_custom_call.1
$region0: #{tpu_custom_call.1}
  #allocation0 [shape = 'u32[]', space=smem, size = 0x4, offset = 0x4, fixed_abs, tag = 'smem constant byte address 0x4 - core index']
  #allocation1 [shape = 'u32[144,128]{1,0:T(1,128)}', space=vmem, size = 0x12000, scoped, tag = 'internal scratch']
  %s0 = inlined_call_operand.hbm [shape: f32[256,128], index: 0, kind: input, shape index: {}]
  %s1 = inlined_call_operand.hbm [shape: bf16[128,128], index: 1, kind: input, shape index: {}]
  %s2 = inlined_call_operand.vmem [shape: f32[1,128], index: 2, kind: input, shape index: {}]
  %s3 = inlined_call_operand.hbm [shape: bf16[128,128], index: 3, kind: input, shape index: {}]
  %s4 = inlined_call_operand.vmem [shape: f32[1,128], index: 4, kind: input, shape index: {}]
  %s5 = inlined_call_operand.hbm [shape: f32[256,128], index: 5, kind: output, shape index: {}]
  %s6 = sld [smem:[#allocation0]]
  $region42: #{tpu_custom_call.1} parent=0
    _
  %s8 = ssub.s32 1, %s6
  %s9 = scalar_select 0, %s8, %s6
  $region1: #{tpu_custom_call.1} parent=0
    #allocation2 [shape = 'u8[131072]{0}', space=vmem, size = 0x20000, scoped, tag = 'input window, operand 0, single buffered']
    #allocation3 [shape = 's32[1]{0}', space=sflag, size = 0x4, scoped, tag = 'scoped memory for tpu_custom_call.1']
    #allocation4 [shape = 's32[1]{0}', space=sflag, size = 0x4, scoped, tag = 'scoped memory for tpu_custom_call.1']
    #allocation5 [shape = 'u8[32768]{0}', space=vmem, size = 0x8000, scoped, tag = 'input window, operand 1, single buffered']
    #allocation6 [shape = 's32[1]{0}', space=sflag, size = 0x4, scoped, tag = 'scoped memory for tpu_custom_call.1']
    #allocation7 [shape = 'u8[32768]{0}', space=vmem, size = 0x8000, scoped, tag = 'input window, operand 3, single buffered']
    #allocation8 [shape = 'u8[131072]{0}', space=vmem, size = 0x20000, scoped, tag = 'output window, operand 0, single buffered']
    %10 = vsyncpa [#allocation3], 0
    %11 = vsyncpa [#allocation6], 0
    %12 = vsyncpa [#allocation4], 0
    // Predicated region
    $region2: #{tpu_custom_call.1} parent=1 // pred_check
      _
    $region3: #{tpu_custom_call.1} parent=1 // pred_check_branch
      %14 = sbr.rel (0) target = $region5
    $region4: #{tpu_custom_call.1} parent=1 // pred_region
      %s16 = ssub.s32 4096, 4096
      %17 = vsyncadd [#allocation3], %s16
      %s18 = sshll.u32 [#allocation2], 4
      %s19 = int_to_ptr.vmem [resolvable:$true] %s18
      %24 = dma.hbm_to_vmem [thread:$0]  %s0, 4096, %s19, [#allocation3], 128, 128, 8
    $region5: #{tpu_custom_call.1} parent=1 // pred_fallthru
      _
    // Predicated region
    $region6: #{tpu_custom_call.1} parent=1 // pred_check
      _
    $region7: #{tpu_custom_call.1} parent=1 // pred_check_branch
      %26 = sbr.rel (0) target = $region9
    $region8: #{tpu_custom_call.1} parent=1 // pred_region
      %s28 = ssub.s32 1024, 1024
      %29 = vsyncadd [#allocation6], %s28
      %s30 = sshll.u32 [#allocation5], 4
      %s31 = int_to_ptr.vmem [resolvable:$true] %s30
      %36 = dma.hbm_to_vmem [thread:$0]  %s1, 1024, %s31, [#allocation6], 64, 64, 4
    $region9: #{tpu_custom_call.1} parent=1 // pred_fallthru
      _
    // Predicated region
    $region10: #{tpu_custom_call.1} parent=1 // pred_check
      _
    $region11: #{tpu_custom_call.1} parent=1 // pred_check_branch
      %38 = sbr.rel (0) target = $region13
    $region12: #{tpu_custom_call.1} parent=1 // pred_region
      _
    $region13: #{tpu_custom_call.1} parent=1 // pred_fallthru
      _
    // Predicated region
    $region14: #{tpu_custom_call.1} parent=1 // pred_check
      _
    $region15: #{tpu_custom_call.1} parent=1 // pred_check_branch
      %40 = sbr.rel (0) target = $region17
    $region16: #{tpu_custom_call.1} parent=1 // pred_region
      %s42 = ssub.s32 1024, 1024
      %43 = vsyncadd [#allocation6], %s42
      %s44 = sshll.u32 [#allocation7], 4
      %s45 = int_to_ptr.vmem [resolvable:$true] %s44
      %50 = dma.hbm_to_vmem [thread:$0]  %s3, 1024, %s45, [#allocation6], 64, 64, 4
    $region17: #{tpu_custom_call.1} parent=1 // pred_fallthru
      _
    // Predicated region
    $region18: #{tpu_custom_call.1} parent=1 // pred_check
      _
    $region19: #{tpu_custom_call.1} parent=1 // pred_check_branch
      %52 = sbr.rel (0) target = $region21
    $region20: #{tpu_custom_call.1} parent=1 // pred_region
      _
    $region21: #{tpu_custom_call.1} parent=1 // pred_fallthru
      _
    // Predicated region
    $region22: #{tpu_custom_call.1} parent=1 // pred_check
      _
    $region23: #{tpu_custom_call.1} parent=1 // pred_check_branch
      %54 = sbr.rel (0) target = $region25
    $region24: #{tpu_custom_call.1} parent=1 // pred_region
      %55 = dma.done [#allocation3], 4096
    $region25: #{tpu_custom_call.1} parent=1 // pred_fallthru
      _
    // Predicated region
    $region26: #{tpu_custom_call.1} parent=1 // pred_check
      _
    $region27: #{tpu_custom_call.1} parent=1 // pred_check_branch
      %57 = sbr.rel (0) target = $region29
    $region28: #{tpu_custom_call.1} parent=1 // pred_region
      %58 = dma.done [#allocation6], 1024
    $region29: #{tpu_custom_call.1} parent=1 // pred_fallthru
      _
    // Predicated region
    $region30: #{tpu_custom_call.1} parent=1 // pred_check
      _
    $region31: #{tpu_custom_call.1} parent=1 // pred_check_branch
      %60 = sbr.rel (0) target = $region33
    $region32: #{tpu_custom_call.1} parent=1 // pred_region
      %61 = dma.done [#allocation6], 1024
    $region33: #{tpu_custom_call.1} parent=1 // pred_fallthru
      _
    %v63 = vld [vmem:[#allocation5] sm:$0xf]
    %v64 = vld [vmem:[#allocation5 + $0x4] sm:$0xf]
    %v65 = vld [vmem:[#allocation5 + $0x8] sm:$0xf]
    %v66 = vld [vmem:[#allocation5 + $0xc] sm:$0xf]
    %v67 = vld [vmem:[#allocation5 + $0x10] sm:$0xf]
    %v68 = vld [vmem:[#allocation5 + $0x14] sm:$0xf]
    %v69 = vld [vmem:[#allocation5 + $0x18] sm:$0xf]
    %v70 = vld [vmem:[#allocation5 + $0x1c] sm:$0xf]
    %v71 = vld [vmem:[#allocation5 + $0x20] sm:$0xf]
    %v72 = vld [vmem:[#allocation5 + $0x24] sm:$0xf]
    %v73 = vld [vmem:[#allocation5 + $0x28] sm:$0xf]
    %v74 = vld [vmem:[#allocation5 + $0x2c] sm:$0xf]
    %v75 = vld [vmem:[#allocation5 + $0x30] sm:$0xf]
    %v76 = vld [vmem:[#allocation5 + $0x34] sm:$0xf]
    %v77 = vld [vmem:[#allocation5 + $0x38] sm:$0xf]
    %v78 = vld [vmem:[#allocation5 + $0x3c] sm:$0xf]
    %v79 = vld [vmem:[#allocation7] sm:$0xf]
    %v80 = vld [vmem:[#allocation7 + $0x4] sm:$0xf]
    %v81 = vld [vmem:[#allocation7 + $0x8] sm:$0xf]
    %v82 = vld [vmem:[#allocation7 + $0xc] sm:$0xf]
    %v83 = vld [vmem:[#allocation7 + $0x10] sm:$0xf]
    %v84 = vld [vmem:[#allocation7 + $0x14] sm:$0xf]
    %v85 = vld [vmem:[#allocation7 + $0x18] sm:$0xf]
    %v86 = vld [vmem:[#allocation7 + $0x1c] sm:$0xf]
    %v87 = vld [vmem:[#allocation7 + $0x20] sm:$0xf]
    %v88 = vld [vmem:[#allocation7 + $0x24] sm:$0xf]
    %v89 = vld [vmem:[#allocation7 + $0x28] sm:$0xf]
    %v90 = vld [vmem:[#allocation7 + $0x2c] sm:$0xf]
    %v91 = vld [vmem:[#allocation7 + $0x30] sm:$0xf]
    %v92 = vld [vmem:[#allocation7 + $0x34] sm:$0xf]
    %v93 = vld [vmem:[#allocation7 + $0x38] sm:$0xf]
    %v94 = vld [vmem:[#allocation7 + $0x3c] sm:$0xf]
    %v95 = vld [vmem:[%s2] sm:$0x1]
    %v96 = vld [vmem:[%s4] sm:$0x1]
    %v97 = vld [vmem:[#allocation2] sm:$0xff]
    %v98 = vld [vmem:[#allocation2 + $0x8] sm:$0xff]
    %v99 = vld [vmem:[#allocation2 + $0x10] sm:$0xff]
    %v100 = vld [vmem:[#allocation2 + $0x18] sm:$0xff]
    %v101 = vld [vmem:[#allocation2 + $0x20] sm:$0xff]
    %v102 = vld [vmem:[#allocation2 + $0x28] sm:$0xff]
    %v103 = vld [vmem:[#allocation2 + $0x30] sm:$0xff]
    %v104 = vld [vmem:[#allocation2 + $0x38] sm:$0xff]
    %v105 = vld [vmem:[#allocation2 + $0x40] sm:$0xff]
    %v106 = vld [vmem:[#allocation2 + $0x48] sm:$0xff]
    %v107 = vld [vmem:[#allocation2 + $0x50] sm:$0xff]
    %v108 = vld [vmem:[#allocation2 + $0x58] sm:$0xff]
    %v109 = vld [vmem:[#allocation2 + $0x60] sm:$0xff]
    %v110 = vld [vmem:[#allocation2 + $0x68] sm:$0xff]
    %v111 = vld [vmem:[#allocation2 + $0x70] sm:$0xff]
    %v112 = vld [vmem:[#allocation2 + $0x78] sm:$0xff]
    %v113 = vpack.c.bf16 %v98, %v97
    %v114 = vpack.c.bf16 %v100, %v99
    %v115 = vpack.c.bf16 %v102, %v101
    %v116 = vpack.c.bf16 %v104, %v103
    %v117 = vpack.c.bf16 %v106, %v105
    %v118 = vpack.c.bf16 %v108, %v107
    %v119 = vpack.c.bf16 %v110, %v109
    %v120 = vpack.c.bf16 %v112, %v111
    %v122 = vlaneseq
    %v123 = vshrl.u32 %v122, 7
    %v124 = vsub.s32 0, %v123
    %v125 = vrot.slane %v95, %v124
    %v143 = vunpack.c.l.b16 %v63
    %v144 = vunpack.c.l.b16 %v64
    %v145 = vunpack.c.l.b16 %v65
    %v146 = vunpack.c.l.b16 %v66
    %v147 = vunpack.c.l.b16 %v67
    %v148 = vunpack.c.l.b16 %v68
    %v149 = vunpack.c.l.b16 %v69
    %v150 = vunpack.c.l.b16 %v70
    %v151 = vunpack.c.l.b16 %v71
    %v152 = vunpack.c.l.b16 %v72
    %v153 = vunpack.c.l.b16 %v73
    %v154 = vunpack.c.l.b16 %v74
    %v155 = vunpack.c.l.b16 %v75
    %v156 = vunpack.c.l.b16 %v76
    %v157 = vunpack.c.l.b16 %v77
    %v158 = vunpack.c.l.b16 %v78
    %v159 = vpack.c.b16 %v144, %v143
    %v160 = vpack.c.b16 %v146, %v145
    %v161 = vpack.c.b16 %v148, %v147
    %v162 = vpack.c.b16 %v150, %v149
    %v163 = vpack.c.b16 %v152, %v151
    %v164 = vpack.c.b16 %v154, %v153
    %v165 = vpack.c.b16 %v156, %v155
    %v166 = vpack.c.b16 %v158, %v157
    %175 = vmatprep.subr.bf16.mxu0 0
    %176 = vmatpush1.bf16.msra.mxu0 %v166
    %177 = vmatprep.subr.bf16.mxu0 0
    %178 = vmatpush1.bf16.msra.mxu0 %v165
    %179 = vmatprep.subr.bf16.mxu0 0
    %180 = vmatpush1.bf16.msra.mxu0 %v164
    %181 = vmatprep.subr.bf16.mxu0 0
    %182 = vmatpush1.bf16.msra.mxu0 %v163
    %183 = vmatprep.subr.bf16.mxu0 0
    %184 = vmatpush1.bf16.msra.mxu0 %v162
    %185 = vmatprep.subr.bf16.mxu0 0
    %186 = vmatpush1.bf16.msra.mxu0 %v161
    %187 = vmatprep.subr.bf16.mxu0 0
    %188 = vmatpush1.bf16.msra.mxu0 %v160
    %189 = vmatprep.subr.bf16.mxu0 0
    %190 = vmatpush1.bf16.msra.mxu0 %v159
    %191 = vmatprep.subr.bf16.mxu0 0
    %192 = vmatpush2.bf16.msra.mxu0 0
    %193 = vmatprep.subr.bf16.mxu0 0
    %194 = vmatpush2.bf16.msra.mxu0 0
    %195 = vmatprep.subr.bf16.mxu0 0
    %196 = vmatpush2.bf16.msra.mxu0 0
    %197 = vmatprep.subr.bf16.mxu0 0
    %198 = vmatpush2.bf16.msra.mxu0 0
    %199 = vmatprep.subr.bf16.mxu0 0
    %200 = vmatpush2.bf16.msra.mxu0 0
    %201 = vmatprep.subr.bf16.mxu0 0
    %202 = vmatpush2.bf16.msra.mxu0 0
    %203 = vmatprep.subr.bf16.mxu0 0
    %204 = vmatpush2.bf16.msra.mxu0 0
    %205 = vmatprep.subr.bf16.mxu0 0
    %206 = vmatpush2.bf16.msra.mxu0 0
    %207 = vmatprep.mubr.bf16.mxu0 0
    %208 = vmatmul.mubr.bf16.gmra.mxu0 %v113
    %v209 = vpop.f32.mrf.mxu0
    %v210 = vadd.f32 %v125, %v209
    %v211 = vpop.f32.mrf.mxu0
    %v212 = vpop.f32.mrf.mxu0
    %v213 = vadd.f32 %v125, %v212
    %v214 = vpop.f32.mrf.mxu0
    %215 = vmatprep.mubr.bf16.mxu0 0
    %216 = vmatmul.mubr.bf16.gmra.mxu0 %v114
    %v217 = vpop.f32.mrf.mxu0
    %v218 = vadd.f32 %v125, %v217
    %v219 = vpop.f32.mrf.mxu0
    %v220 = vpop.f32.mrf.mxu0
    %v221 = vadd.f32 %v125, %v220
    %v222 = vpop.f32.mrf.mxu0
    %223 = vmatprep.mubr.bf16.mxu0 0
    %224 = vmatmul.mubr.bf16.gmra.mxu0 %v115
    %v225 = vpop.f32.mrf.mxu0
    %v226 = vadd.f32 %v125, %v225
    %v227 = vpop.f32.mrf.mxu0
    %v228 = vpop.f32.mrf.mxu0
    %v229 = vadd.f32 %v125, %v228
    %v230 = vpop.f32.mrf.mxu0
    %231 = vmatprep.mubr.bf16.mxu0 0
    %232 = vmatmul.mubr.bf16.gmra.mxu0 %v116
    %v233 = vpop.f32.mrf.mxu0
    %v234 = vadd.f32 %v125, %v233
    %v235 = vpop.f32.mrf.mxu0
    %v236 = vpop.f32.mrf.mxu0
    %v237 = vadd.f32 %v125, %v236
    %v238 = vpop.f32.mrf.mxu0
    %239 = vmatprep.mubr.bf16.mxu0 0
    %240 = vmatmul.mubr.bf16.gmra.mxu0 %v117
    %v241 = vpop.f32.mrf.mxu0
    %v242 = vadd.f32 %v125, %v241
    %v243 = vpop.f32.mrf.mxu0
    %v244 = vpop.f32.mrf.mxu0
    %v245 = vadd.f32 %v125, %v244
    %v246 = vpop.f32.mrf.mxu0
    %247 = vmatprep.mubr.bf16.mxu0 0
    %248 = vmatmul.mubr.bf16.gmra.mxu0 %v118
    %v249 = vpop.f32.mrf.mxu0
    %v250 = vadd.f32 %v125, %v249
    %v251 = vpop.f32.mrf.mxu0
    %v252 = vpop.f32.mrf.mxu0
    %v253 = vadd.f32 %v125, %v252
    %v254 = vpop.f32.mrf.mxu0
    %255 = vmatprep.mubr.bf16.mxu0 0
    %256 = vmatmul.mubr.bf16.gmra.mxu0 %v119
    %v257 = vpop.f32.mrf.mxu0
    %v258 = vadd.f32 %v125, %v257
    %v259 = vpop.f32.mrf.mxu0
    %v260 = vpop.f32.mrf.mxu0
    %v261 = vadd.f32 %v125, %v260
    %v262 = vpop.f32.mrf.mxu0
    %263 = vmatprep.mubr.bf16.mxu0 0
    %264 = vmatmul.mubr.bf16.gmra.mxu0 %v120
    %v265 = vpop.f32.mrf.mxu0
    %v266 = vadd.f32 %v125, %v265
    %v267 = vpop.f32.mrf.mxu0
    %v268 = vpop.f32.mrf.mxu0
    %v269 = vadd.f32 %v125, %v268
    %v270 = vpop.f32.mrf.mxu0
    %271 = vdwg.mxu0
    %v272 = vmul.f32 %v210, 0.5
    %v273 = vmul.f32 %v213, 0.5
    %v274 = vmul.f32 %v218, 0.5
    %v275 = vmul.f32 %v221, 0.5
    %v276 = vmul.f32 %v226, 0.5
    %v277 = vmul.f32 %v229, 0.5
    %v278 = vmul.f32 %v234, 0.5
    %v279 = vmul.f32 %v237, 0.5
    %v280 = vmul.f32 %v242, 0.5
    %v281 = vmul.f32 %v245, 0.5
    %v282 = vmul.f32 %v250, 0.5
    %v283 = vmul.f32 %v253, 0.5
    %v284 = vmul.f32 %v258, 0.5
    %v285 = vmul.f32 %v261, 0.5
    %v286 = vmul.f32 %v266, 0.5
    %v287 = vmul.f32 %v269, 0.5
    %v288 = vmul.f32 %v210, 0.70710677
    %v289 = vmul.f32 %v213, 0.70710677
    %v290 = vmul.f32 %v218, 0.70710677
    %v291 = vmul.f32 %v221, 0.70710677
    %v292 = vmul.f32 %v226, 0.70710677
    %v293 = vmul.f32 %v229, 0.70710677
    %v294 = vmul.f32 %v234, 0.70710677
    %v295 = vmul.f32 %v237, 0.70710677
    %v296 = vmul.f32 %v242, 0.70710677
    %v297 = vmul.f32 %v245, 0.70710677
    %v298 = vmul.f32 %v250, 0.70710677
    %v299 = vmul.f32 %v253, 0.70710677
    %v300 = vmul.f32 %v258, 0.70710677
    %v301 = vmul.f32 %v261, 0.70710677
    %v302 = vmul.f32 %v266, 0.70710677
    %v303 = vmul.f32 %v269, 0.70710677
    %v304 = verf.f32.pop %v288
    %v305 = verf.f32.pop %v289
    %v306 = verf.f32.pop %v290
    %v307 = verf.f32.pop %v291
    %v308 = verf.f32.pop %v292
    %v309 = verf.f32.pop %v293
    %v310 = verf.f32.pop %v294
    %v311 = verf.f32.pop %v295
    %v312 = verf.f32.pop %v296
    %v313 = verf.f32.pop %v297
    %v314 = verf.f32.pop %v298
    %v315 = verf.f32.pop %v299
    %v316 = verf.f32.pop %v300
    %v317 = verf.f32.pop %v301
    %v318 = verf.f32.pop %v302
    %v319 = verf.f32.pop %v303
    %v320 = vadd.f32 %v304, 1.0
    %v321 = vadd.f32 %v305, 1.0
    %v322 = vadd.f32 %v306, 1.0
    %v323 = vadd.f32 %v307, 1.0
    %v324 = vadd.f32 %v308, 1.0
    %v325 = vadd.f32 %v309, 1.0
    %v326 = vadd.f32 %v310, 1.0
    %v327 = vadd.f32 %v311, 1.0
    %v328 = vadd.f32 %v312, 1.0
    %v329 = vadd.f32 %v313, 1.0
    %v330 = vadd.f32 %v314, 1.0
    %v331 = vadd.f32 %v315, 1.0
    %v332 = vadd.f32 %v316, 1.0
    %v333 = vadd.f32 %v317, 1.0
    %v334 = vadd.f32 %v318, 1.0
    %v335 = vadd.f32 %v319, 1.0
    %v336 = vmul.f32 %v272, %v320
    %v337 = vmul.f32 %v273, %v321
    %v338 = vmul.f32 %v274, %v322
    %v339 = vmul.f32 %v275, %v323
    %v340 = vmul.f32 %v276, %v324
    %v341 = vmul.f32 %v277, %v325
    %v342 = vmul.f32 %v278, %v326
    %v343 = vmul.f32 %v279, %v327
    %v344 = vmul.f32 %v280, %v328
    %v345 = vmul.f32 %v281, %v329
    %v346 = vmul.f32 %v282, %v330
    %v347 = vmul.f32 %v283, %v331
    %v348 = vmul.f32 %v284, %v332
    %v349 = vmul.f32 %v285, %v333
    %v350 = vmul.f32 %v286, %v334
    %v351 = vmul.f32 %v287, %v335
    %v352 = vpack.c.bf16 %v337, %v336
    %v353 = vpack.c.bf16 %v339, %v338
    %v354 = vpack.c.bf16 %v341, %v340
    %v355 = vpack.c.bf16 %v343, %v342
    %v356 = vpack.c.bf16 %v345, %v344
    %v357 = vpack.c.bf16 %v347, %v346
    %v358 = vpack.c.bf16 %v349, %v348
    %v359 = vpack.c.bf16 %v351, %v350
    %360 = vmatprep.subr.bf16.mxu0 0
    %361 = vmatpush1.bf16.msra.mxu0 %v166
    %362 = vmatprep.subr.bf16.mxu0 0
    %363 = vmatpush1.bf16.msra.mxu0 %v165
    %364 = vmatprep.subr.bf16.mxu0 0
    %365 = vmatpush1.bf16.msra.mxu0 %v164
    %366 = vmatprep.subr.bf16.mxu0 0
    %367 = vmatpush1.bf16.msra.mxu0 %v163
    %368 = vmatprep.subr.bf16.mxu0 0
    %369 = vmatpush1.bf16.msra.mxu0 %v162
    %370 = vmatprep.subr.bf16.mxu0 0
    %371 = vmatpush1.bf16.msra.mxu0 %v161
    %372 = vmatprep.subr.bf16.mxu0 0
    %373 = vmatpush1.bf16.msra.mxu0 %v160
    %374 = vmatprep.subr.bf16.mxu0 0
    %375 = vmatpush1.bf16.msra.mxu0 %v159
    %376 = vmatprep.subr.bf16.mxu0 0
    %377 = vmatpush2.bf16.msra.mxu0 0
    %378 = vmatprep.subr.bf16.mxu0 0
    %379 = vmatpush2.bf16.msra.mxu0 0
    %380 = vmatprep.subr.bf16.mxu0 0
    %381 = vmatpush2.bf16.msra.mxu0 0
    %382 = vmatprep.subr.bf16.mxu0 0
    %383 = vmatpush2.bf16.msra.mxu0 0
    %384 = vmatprep.subr.bf16.mxu0 0
    %385 = vmatpush2.bf16.msra.mxu0 0
    %386 = vmatprep.subr.bf16.mxu0 0
    %387 = vmatpush2.bf16.msra.mxu0 0
    %388 = vmatprep.subr.bf16.mxu0 0
    %389 = vmatpush2.bf16.msra.mxu0 0
    %390 = vmatprep.subr.bf16.mxu0 0
    %391 = vmatpush2.bf16.msra.mxu0 0
    %392 = vmatprep.mubr.bf16.mxu0 0
    %393 = vmatmul.mubr.bf16.gmra.mxu0 %v352
    %v394 = vpop.f32.mrf.mxu0
    %v395 = vadd.f32 %v125, %v394
    %v396 = vpop.f32.mrf.mxu0
    %v397 = vpop.f32.mrf.mxu0
    %v398 = vadd.f32 %v125, %v397
    %v399 = vpop.f32.mrf.mxu0
    %400 = vmatprep.mubr.bf16.mxu0 0
    %401 = vmatmul.mubr.bf16.gmra.mxu0 %v353
    %v402 = vpop.f32.mrf.mxu0
    %v403 = vadd.f32 %v125, %v402
    %v404 = vpop.f32.mrf.mxu0
    %v405 = vpop.f32.mrf.mxu0
    %v406 = vadd.f32 %v125, %v405
    %v407 = vpop.f32.mrf.mxu0
    %408 = vmatprep.mubr.bf16.mxu0 0
    %409 = vmatmul.mubr.bf16.gmra.mxu0 %v354
    %v410 = vpop.f32.mrf.mxu0
    %v411 = vadd.f32 %v125, %v410
    %v412 = vpop.f32.mrf.mxu0
    %v413 = vpop.f32.mrf.mxu0
    %v414 = vadd.f32 %v125, %v413
    %v415 = vpop.f32.mrf.mxu0
    %416 = vmatprep.mubr.bf16.mxu0 0
    %417 = vmatmul.mubr.bf16.gmra.mxu0 %v355
    %v418 = vpop.f32.mrf.mxu0
    %v419 = vadd.f32 %v125, %v418
    %v420 = vpop.f32.mrf.mxu0
    %v421 = vpop.f32.mrf.mxu0
    %v422 = vadd.f32 %v125, %v421
    %v423 = vpop.f32.mrf.mxu0
    %424 = vmatprep.mubr.bf16.mxu0 0
    %425 = vmatmul.mubr.bf16.gmra.mxu0 %v356
    %v426 = vpop.f32.mrf.mxu0
    %v427 = vadd.f32 %v125, %v426
    %v428 = vpop.f32.mrf.mxu0
    %v429 = vpop.f32.mrf.mxu0
    %v430 = vadd.f32 %v125, %v429
    %v431 = vpop.f32.mrf.mxu0
    %432 = vmatprep.mubr.bf16.mxu0 0
    %433 = vmatmul.mubr.bf16.gmra.mxu0 %v357
    %v434 = vpop.f32.mrf.mxu0
    %v435 = vadd.f32 %v125, %v434
    %v436 = vpop.f32.mrf.mxu0
    %v437 = vpop.f32.mrf.mxu0
    %v438 = vadd.f32 %v125, %v437
    %v439 = vpop.f32.mrf.mxu0
    %440 = vmatprep.mubr.bf16.mxu0 0
    %441 = vmatmul.mubr.bf16.gmra.mxu0 %v358
    %v442 = vpop.f32.mrf.mxu0
    %v443 = vadd.f32 %v125, %v442
    %v444 = vpop.f32.mrf.mxu0
    %v445 = vpop.f32.mrf.mxu0
    %v446 = vadd.f32 %v125, %v445
    %v447 = vpop.f32.mrf.mxu0
    %448 = vmatprep.mubr.bf16.mxu0 0
    %449 = vmatmul.mubr.bf16.gmra.mxu0 %v359
    %v450 = vpop.f32.mrf.mxu0
    %v451 = vadd.f32 %v125, %v450
    %v452 = vpop.f32.mrf.mxu0
    %v453 = vpop.f32.mrf.mxu0
    %v454 = vadd.f32 %v125, %v453
    %v455 = vpop.f32.mrf.mxu0
    %456 = vdwg.mxu0
    %v457 = vmul.f32 %v395, 0.5
    %v458 = vmul.f32 %v398, 0.5
    %v459 = vmul.f32 %v403, 0.5
    %v460 = vmul.f32 %v406, 0.5
    %v461 = vmul.f32 %v411, 0.5
    %v462 = vmul.f32 %v414, 0.5
    %v463 = vmul.f32 %v419, 0.5
    %v464 = vmul.f32 %v422, 0.5
    %v465 = vmul.f32 %v427, 0.5
    %v466 = vmul.f32 %v430, 0.5
    %v467 = vmul.f32 %v435, 0.5
    %v468 = vmul.f32 %v438, 0.5
    %v469 = vmul.f32 %v443, 0.5
    %v470 = vmul.f32 %v446, 0.5
    %v471 = vmul.f32 %v451, 0.5
    %v472 = vmul.f32 %v454, 0.5
    %v473 = vmul.f32 %v395, 0.70710677
    %v474 = vmul.f32 %v398, 0.70710677
    %v475 = vmul.f32 %v403, 0.70710677
    %v476 = vmul.f32 %v406, 0.70710677
    %v477 = vmul.f32 %v411, 0.70710677
    %v478 = vmul.f32 %v414, 0.70710677
    %v479 = vmul.f32 %v419, 0.70710677
    %v480 = vmul.f32 %v422, 0.70710677
    %v481 = vmul.f32 %v427, 0.70710677
    %v482 = vmul.f32 %v430, 0.70710677
    %v483 = vmul.f32 %v435, 0.70710677
    %v484 = vmul.f32 %v438, 0.70710677
    %v485 = vmul.f32 %v443, 0.70710677
    %v486 = vmul.f32 %v446, 0.70710677
    %v487 = vmul.f32 %v451, 0.70710677
    %v488 = vmul.f32 %v454, 0.70710677
    %v489 = verf.f32.pop %v473
    %v490 = verf.f32.pop %v474
    %v491 = verf.f32.pop %v475
    %v492 = verf.f32.pop %v476
    %v493 = verf.f32.pop %v477
    %v494 = verf.f32.pop %v478
    %v495 = verf.f32.pop %v479
    %v496 = verf.f32.pop %v480
    %v497 = verf.f32.pop %v481
    %v498 = verf.f32.pop %v482
    %v499 = verf.f32.pop %v483
    %v500 = verf.f32.pop %v484
    %v501 = verf.f32.pop %v485
    %v502 = verf.f32.pop %v486
    %v503 = verf.f32.pop %v487
    %v504 = verf.f32.pop %v488
    %v505 = vadd.f32 %v489, 1.0
    %v506 = vadd.f32 %v490, 1.0
    %v507 = vadd.f32 %v491, 1.0
    %v508 = vadd.f32 %v492, 1.0
    %v509 = vadd.f32 %v493, 1.0
    %v510 = vadd.f32 %v494, 1.0
    %v511 = vadd.f32 %v495, 1.0
    %v512 = vadd.f32 %v496, 1.0
    %v513 = vadd.f32 %v497, 1.0
    %v514 = vadd.f32 %v498, 1.0
    %v515 = vadd.f32 %v499, 1.0
    %v516 = vadd.f32 %v500, 1.0
    %v517 = vadd.f32 %v501, 1.0
    %v518 = vadd.f32 %v502, 1.0
    %v519 = vadd.f32 %v503, 1.0
    %v520 = vadd.f32 %v504, 1.0
    %v521 = vmul.f32 %v457, %v505
    %v522 = vmul.f32 %v458, %v506
    %v523 = vmul.f32 %v459, %v507
    %v524 = vmul.f32 %v460, %v508
    %v525 = vmul.f32 %v461, %v509
    %v526 = vmul.f32 %v462, %v510
    %v527 = vmul.f32 %v463, %v511
    %v528 = vmul.f32 %v464, %v512
    %v529 = vmul.f32 %v465, %v513
    %v530 = vmul.f32 %v466, %v514
    %v531 = vmul.f32 %v467, %v515
    %v532 = vmul.f32 %v468, %v516
    %v533 = vmul.f32 %v469, %v517
    %v534 = vmul.f32 %v470, %v518
    %v535 = vmul.f32 %v471, %v519
    %v536 = vmul.f32 %v472, %v520
    %v537 = vpack.c.bf16 %v522, %v521
    %v538 = vpack.c.bf16 %v524, %v523
    %v539 = vpack.c.bf16 %v526, %v525
    %v540 = vpack.c.bf16 %v528, %v527
    %v541 = vpack.c.bf16 %v530, %v529
    %v542 = vpack.c.bf16 %v532, %v531
    %v543 = vpack.c.bf16 %v534, %v533
    %v544 = vpack.c.bf16 %v536, %v535
    %v546 = vlaneseq
    %v547 = vshrl.u32 %v546, 7
    %v548 = vsub.s32 0, %v547
    %v549 = vrot.slane %v96, %v548
    %v567 = vunpack.c.l.b16 %v79
    %v568 = vunpack.c.l.b16 %v80
    %v569 = vunpack.c.l.b16 %v81
    %v570 = vunpack.c.l.b16 %v82
    %v571 = vunpack.c.l.b16 %v83
    %v572 = vunpack.c.l.b16 %v84
    %v573 = vunpack.c.l.b16 %v85
    %v574 = vunpack.c.l.b16 %v86
    %v575 = vunpack.c.l.b16 %v87
    %v576 = vunpack.c.l.b16 %v88
    %v577 = vunpack.c.l.b16 %v89
    %v578 = vunpack.c.l.b16 %v90
    %v579 = vunpack.c.l.b16 %v91
    %v580 = vunpack.c.l.b16 %v92
    %v581 = vunpack.c.l.b16 %v93
    %v582 = vunpack.c.l.b16 %v94
    %v583 = vpack.c.b16 %v568, %v567
    %v584 = vpack.c.b16 %v570, %v569
    %v585 = vpack.c.b16 %v572, %v571
    %v586 = vpack.c.b16 %v574, %v573
    %v587 = vpack.c.b16 %v576, %v575
    %v588 = vpack.c.b16 %v578, %v577
    %v589 = vpack.c.b16 %v580, %v579
    %v590 = vpack.c.b16 %v582, %v581
    %599 = vmatprep.subr.bf16.mxu0 0
    %600 = vmatpush1.bf16.msra.mxu0 %v590
    %601 = vmatprep.subr.bf16.mxu0 0
    %602 = vmatpush1.bf16.msra.mxu0 %v589
    %603 = vmatprep.subr.bf16.mxu0 0
    %604 = vmatpush1.bf16.msra.mxu0 %v588
    %605 = vmatprep.subr.bf16.mxu0 0
    %606 = vmatpush1.bf16.msra.mxu0 %v587
    %607 = vmatprep.subr.bf16.mxu0 0
    %608 = vmatpush1.bf16.msra.mxu0 %v586
    %609 = vmatprep.subr.bf16.mxu0 0
    %610 = vmatpush1.bf16.msra.mxu0 %v585
    %611 = vmatprep.subr.bf16.mxu0 0
    %612 = vmatpush1.bf16.msra.mxu0 %v584
    %613 = vmatprep.subr.bf16.mxu0 0
    %614 = vmatpush1.bf16.msra.mxu0 %v583
    %615 = vmatprep.subr.bf16.mxu0 0
    %616 = vmatpush2.bf16.msra.mxu0 0
    %617 = vmatprep.subr.bf16.mxu0 0
    %618 = vmatpush2.bf16.msra.mxu0 0
    %619 = vmatprep.subr.bf16.mxu0 0
    %620 = vmatpush2.bf16.msra.mxu0 0
    %621 = vmatprep.subr.bf16.mxu0 0
    %622 = vmatpush2.bf16.msra.mxu0 0
    %623 = vmatprep.subr.bf16.mxu0 0
    %624 = vmatpush2.bf16.msra.mxu0 0
    %625 = vmatprep.subr.bf16.mxu0 0
    %626 = vmatpush2.bf16.msra.mxu0 0
    %627 = vmatprep.subr.bf16.mxu0 0
    %628 = vmatpush2.bf16.msra.mxu0 0
    %629 = vmatprep.subr.bf16.mxu0 0
    %630 = vmatpush2.bf16.msra.mxu0 0
    %631 = vmatprep.mubr.bf16.mxu0 0
    %632 = vmatmul.mubr.bf16.gmra.mxu0 %v537
    %v633 = vpop.f32.mrf.mxu0
    %v634 = vadd.f32 %v549, %v633
    %v635 = vpop.f32.mrf.mxu0
    %v636 = vpop.f32.mrf.mxu0
    %v637 = vadd.f32 %v549, %v636
    %v638 = vpop.f32.mrf.mxu0
    %639 = vmatprep.mubr.bf16.mxu0 0
    %640 = vmatmul.mubr.bf16.gmra.mxu0 %v538
    %v641 = vpop.f32.mrf.mxu0
    %v642 = vadd.f32 %v549, %v641
    %v643 = vpop.f32.mrf.mxu0
    %v644 = vpop.f32.mrf.mxu0
    %v645 = vadd.f32 %v549, %v644
    %v646 = vpop.f32.mrf.mxu0
    %647 = vmatprep.mubr.bf16.mxu0 0
    %648 = vmatmul.mubr.bf16.gmra.mxu0 %v539
    %v649 = vpop.f32.mrf.mxu0
    %v650 = vadd.f32 %v549, %v649
    %v651 = vpop.f32.mrf.mxu0
    %v652 = vpop.f32.mrf.mxu0
    %v653 = vadd.f32 %v549, %v652
    %v654 = vpop.f32.mrf.mxu0
    %655 = vmatprep.mubr.bf16.mxu0 0
    %656 = vmatmul.mubr.bf16.gmra.mxu0 %v540
    %v657 = vpop.f32.mrf.mxu0
    %v658 = vadd.f32 %v549, %v657
    %v659 = vpop.f32.mrf.mxu0
    %v660 = vpop.f32.mrf.mxu0
    %v661 = vadd.f32 %v549, %v660
    %v662 = vpop.f32.mrf.mxu0
    %663 = vmatprep.mubr.bf16.mxu0 0
    %664 = vmatmul.mubr.bf16.gmra.mxu0 %v541
    %v665 = vpop.f32.mrf.mxu0
    %v666 = vadd.f32 %v549, %v665
    %v667 = vpop.f32.mrf.mxu0
    %v668 = vpop.f32.mrf.mxu0
    %v669 = vadd.f32 %v549, %v668
    %v670 = vpop.f32.mrf.mxu0
    %671 = vmatprep.mubr.bf16.mxu0 0
    %672 = vmatmul.mubr.bf16.gmra.mxu0 %v542
    %v673 = vpop.f32.mrf.mxu0
    %v674 = vadd.f32 %v549, %v673
    %v675 = vpop.f32.mrf.mxu0
    %v676 = vpop.f32.mrf.mxu0
    %v677 = vadd.f32 %v549, %v676
    %v678 = vpop.f32.mrf.mxu0
    %679 = vmatprep.mubr.bf16.mxu0 0
    %680 = vmatmul.mubr.bf16.gmra.mxu0 %v543
    %v681 = vpop.f32.mrf.mxu0
    %v682 = vadd.f32 %v549, %v681
    %v683 = vpop.f32.mrf.mxu0
    %v684 = vpop.f32.mrf.mxu0
    %v685 = vadd.f32 %v549, %v684
    %v686 = vpop.f32.mrf.mxu0
    %687 = vmatprep.mubr.bf16.mxu0 0
    %688 = vmatmul.mubr.bf16.gmra.mxu0 %v544
    %v689 = vpop.f32.mrf.mxu0
    %v690 = vadd.f32 %v549, %v689
    %v691 = vpop.f32.mrf.mxu0
    %v692 = vpop.f32.mrf.mxu0
    %v693 = vadd.f32 %v549, %v692
    %v694 = vpop.f32.mrf.mxu0
    %695 = vdwg.mxu0
    %696 = vst [vmem:[#allocation8] sm:$0xff] %v634
    %697 = vst [vmem:[#allocation8 + $0x8] sm:$0xff] %v637
    %698 = vst [vmem:[#allocation8 + $0x10] sm:$0xff] %v642
    %699 = vst [vmem:[#allocation8 + $0x18] sm:$0xff] %v645
    %700 = vst [vmem:[#allocation8 + $0x20] sm:$0xff] %v650
    %701 = vst [vmem:[#allocation8 + $0x28] sm:$0xff] %v653
    %702 = vst [vmem:[#allocation8 + $0x30] sm:$0xff] %v658
    %703 = vst [vmem:[#allocation8 + $0x38] sm:$0xff] %v661
    %704 = vst [vmem:[#allocation8 + $0x40] sm:$0xff] %v666
    %705 = vst [vmem:[#allocation8 + $0x48] sm:$0xff] %v669
    %706 = vst [vmem:[#allocation8 + $0x50] sm:$0xff] %v674
    %707 = vst [vmem:[#allocation8 + $0x58] sm:$0xff] %v677
    %708 = vst [vmem:[#allocation8 + $0x60] sm:$0xff] %v682
    %709 = vst [vmem:[#allocation8 + $0x68] sm:$0xff] %v685
    %710 = vst [vmem:[#allocation8 + $0x70] sm:$0xff] %v690
    %711 = vst [vmem:[#allocation8 + $0x78] sm:$0xff] %v693
    %v712 = vld [vmem:[#allocation2 + $0x80] sm:$0xff]
    %v713 = vld [vmem:[#allocation2 + $0x88] sm:$0xff]
    %v714 = vld [vmem:[#allocation2 + $0x90] sm:$0xff]
    %v715 = vld [vmem:[#allocation2 + $0x98] sm:$0xff]
    %v716 = vld [vmem:[#allocation2 + $0xa0] sm:$0xff]
    %v717 = vld [vmem:[#allocation2 + $0xa8] sm:$0xff]
    %v718 = vld [vmem:[#allocation2 + $0xb0] sm:$0xff]
    %v719 = vld [vmem:[#allocation2 + $0xb8] sm:$0xff]
    %v720 = vld [vmem:[#allocation2 + $0xc0] sm:$0xff]
    %v721 = vld [vmem:[#allocation2 + $0xc8] sm:$0xff]
    %v722 = vld [vmem:[#allocation2 + $0xd0] sm:$0xff]
    %v723 = vld [vmem:[#allocation2 + $0xd8] sm:$0xff]
    %v724 = vld [vmem:[#allocation2 + $0xe0] sm:$0xff]
    %v725 = vld [vmem:[#allocation2 + $0xe8] sm:$0xff]
    %v726 = vld [vmem:[#allocation2 + $0xf0] sm:$0xff]
    %v727 = vld [vmem:[#allocation2 + $0xf8] sm:$0xff]
    %v728 = vpack.c.bf16 %v713, %v712
    %v729 = vpack.c.bf16 %v715, %v714
    %v730 = vpack.c.bf16 %v717, %v716
    %v731 = vpack.c.bf16 %v719, %v718
    %v732 = vpack.c.bf16 %v721, %v720
    %v733 = vpack.c.bf16 %v723, %v722
    %v734 = vpack.c.bf16 %v725, %v724
    %v735 = vpack.c.bf16 %v727, %v726
    %736 = vmatprep.subr.bf16.mxu0 0
    %737 = vmatpush1.bf16.msra.mxu0 %v166
    %738 = vmatprep.subr.bf16.mxu0 0
    %739 = vmatpush1.bf16.msra.mxu0 %v165
    %740 = vmatprep.subr.bf16.mxu0 0
    %741 = vmatpush1.bf16.msra.mxu0 %v164
    %742 = vmatprep.subr.bf16.mxu0 0
    %743 = vmatpush1.bf16.msra.mxu0 %v163
    %744 = vmatprep.subr.bf16.mxu0 0
    %745 = vmatpush1.bf16.msra.mxu0 %v162
    %746 = vmatprep.subr.bf16.mxu0 0
    %747 = vmatpush1.bf16.msra.mxu0 %v161
    %748 = vmatprep.subr.bf16.mxu0 0
    %749 = vmatpush1.bf16.msra.mxu0 %v160
    %750 = vmatprep.subr.bf16.mxu0 0
    %751 = vmatpush1.bf16.msra.mxu0 %v159
    %752 = vmatprep.subr.bf16.mxu0 0
    %753 = vmatpush2.bf16.msra.mxu0 0
    %754 = vmatprep.subr.bf16.mxu0 0
    %755 = vmatpush2.bf16.msra.mxu0 0
    %756 = vmatprep.subr.bf16.mxu0 0
    %757 = vmatpush2.bf16.msra.mxu0 0
    %758 = vmatprep.subr.bf16.mxu0 0
    %759 = vmatpush2.bf16.msra.mxu0 0
    %760 = vmatprep.subr.bf16.mxu0 0
    %761 = vmatpush2.bf16.msra.mxu0 0
    %762 = vmatprep.subr.bf16.mxu0 0
    %763 = vmatpush2.bf16.msra.mxu0 0
    %764 = vmatprep.subr.bf16.mxu0 0
    %765 = vmatpush2.bf16.msra.mxu0 0
    %766 = vmatprep.subr.bf16.mxu0 0
    %767 = vmatpush2.bf16.msra.mxu0 0
    %768 = vmatprep.mubr.bf16.mxu0 0
    %769 = vmatmul.mubr.bf16.gmra.mxu0 %v728
    %v770 = vpop.f32.mrf.mxu0
    %v771 = vadd.f32 %v125, %v770
    %v772 = vpop.f32.mrf.mxu0
    %v773 = vpop.f32.mrf.mxu0
    %v774 = vadd.f32 %v125, %v773
    %v775 = vpop.f32.mrf.mxu0
    %776 = vmatprep.mubr.bf16.mxu0 0
    %777 = vmatmul.mubr.bf16.gmra.mxu0 %v729
    %v778 = vpop.f32.mrf.mxu0
    %v779 = vadd.f32 %v125, %v778
    %v780 = vpop.f32.mrf.mxu0
    %v781 = vpop.f32.mrf.mxu0
    %v782 = vadd.f32 %v125, %v781
    %v783 = vpop.f32.mrf.mxu0
    %784 = vmatprep.mubr.bf16.mxu0 0
    %785 = vmatmul.mubr.bf16.gmra.mxu0 %v730
    %v786 = vpop.f32.mrf.mxu0
    %v787 = vadd.f32 %v125, %v786
    %v788 = vpop.f32.mrf.mxu0
    %v789 = vpop.f32.mrf.mxu0
    %v790 = vadd.f32 %v125, %v789
    %v791 = vpop.f32.mrf.mxu0
    %792 = vmatprep.mubr.bf16.mxu0 0
    %793 = vmatmul.mubr.bf16.gmra.mxu0 %v731
    %v794 = vpop.f32.mrf.mxu0
    %v795 = vadd.f32 %v125, %v794
    %v796 = vpop.f32.mrf.mxu0
    %v797 = vpop.f32.mrf.mxu0
    %v798 = vadd.f32 %v125, %v797
    %v799 = vpop.f32.mrf.mxu0
    %800 = vmatprep.mubr.bf16.mxu0 0
    %801 = vmatmul.mubr.bf16.gmra.mxu0 %v732
    %v802 = vpop.f32.mrf.mxu0
    %v803 = vadd.f32 %v125, %v802
    %v804 = vpop.f32.mrf.mxu0
    %v805 = vpop.f32.mrf.mxu0
    %v806 = vadd.f32 %v125, %v805
    %v807 = vpop.f32.mrf.mxu0
    %808 = vmatprep.mubr.bf16.mxu0 0
    %809 = vmatmul.mubr.bf16.gmra.mxu0 %v733
    %v810 = vpop.f32.mrf.mxu0
    %v811 = vadd.f32 %v125, %v810
    %v812 = vpop.f32.mrf.mxu0
    %v813 = vpop.f32.mrf.mxu0
    %v814 = vadd.f32 %v125, %v813
    %v815 = vpop.f32.mrf.mxu0
    %816 = vmatprep.mubr.bf16.mxu0 0
    %817 = vmatmul.mubr.bf16.gmra.mxu0 %v734
    %v818 = vpop.f32.mrf.mxu0
    %v819 = vadd.f32 %v125, %v818
    %v820 = vpop.f32.mrf.mxu0
    %v821 = vpop.f32.mrf.mxu0
    %v822 = vadd.f32 %v125, %v821
    %v823 = vpop.f32.mrf.mxu0
    %824 = vmatprep.mubr.bf16.mxu0 0
    %825 = vmatmul.mubr.bf16.gmra.mxu0 %v735
    %v826 = vpop.f32.mrf.mxu0
    %v827 = vadd.f32 %v125, %v826
    %v828 = vpop.f32.mrf.mxu0
    %v829 = vpop.f32.mrf.mxu0
    %v830 = vadd.f32 %v125, %v829
    %v831 = vpop.f32.mrf.mxu0
    %832 = vdwg.mxu0
    %v833 = vmul.f32 %v771, 0.5
    %v834 = vmul.f32 %v774, 0.5
    %v835 = vmul.f32 %v779, 0.5
    %v836 = vmul.f32 %v782, 0.5
    %v837 = vmul.f32 %v787, 0.5
    %v838 = vmul.f32 %v790, 0.5
    %v839 = vmul.f32 %v795, 0.5
    %v840 = vmul.f32 %v798, 0.5
    %v841 = vmul.f32 %v803, 0.5
    %v842 = vmul.f32 %v806, 0.5
    %v843 = vmul.f32 %v811, 0.5
    %v844 = vmul.f32 %v814, 0.5
    %v845 = vmul.f32 %v819, 0.5
    %v846 = vmul.f32 %v822, 0.5
    %v847 = vmul.f32 %v827, 0.5
    %v848 = vmul.f32 %v830, 0.5
    %v849 = vmul.f32 %v771, 0.70710677
    %v850 = vmul.f32 %v774, 0.70710677
    %v851 = vmul.f32 %v779, 0.70710677
    %v852 = vmul.f32 %v782, 0.70710677
    %v853 = vmul.f32 %v787, 0.70710677
    %v854 = vmul.f32 %v790, 0.70710677
    %v855 = vmul.f32 %v795, 0.70710677
    %v856 = vmul.f32 %v798, 0.70710677
    %v857 = vmul.f32 %v803, 0.70710677
    %v858 = vmul.f32 %v806, 0.70710677
    %v859 = vmul.f32 %v811, 0.70710677
    %v860 = vmul.f32 %v814, 0.70710677
    %v861 = vmul.f32 %v819, 0.70710677
    %v862 = vmul.f32 %v822, 0.70710677
    %v863 = vmul.f32 %v827, 0.70710677
    %v864 = vmul.f32 %v830, 0.70710677
    %v865 = verf.f32.pop %v849
    %v866 = verf.f32.pop %v850
    %v867 = verf.f32.pop %v851
    %v868 = verf.f32.pop %v852
    %v869 = verf.f32.pop %v853
    %v870 = verf.f32.pop %v854
    %v871 = verf.f32.pop %v855
    %v872 = verf.f32.pop %v856
    %v873 = verf.f32.pop %v857
    %v874 = verf.f32.pop %v858
    %v875 = verf.f32.pop %v859
    %v876 = verf.f32.pop %v860
    %v877 = verf.f32.pop %v861
    %v878 = verf.f32.pop %v862
    %v879 = verf.f32.pop %v863
    %v880 = verf.f32.pop %v864
    %v881 = vadd.f32 %v865, 1.0
    %v882 = vadd.f32 %v866, 1.0
    %v883 = vadd.f32 %v867, 1.0
    %v884 = vadd.f32 %v868, 1.0
    %v885 = vadd.f32 %v869, 1.0
    %v886 = vadd.f32 %v870, 1.0
    %v887 = vadd.f32 %v871, 1.0
    %v888 = vadd.f32 %v872, 1.0
    %v889 = vadd.f32 %v873, 1.0
    %v890 = vadd.f32 %v874, 1.0
    %v891 = vadd.f32 %v875, 1.0
    %v892 = vadd.f32 %v876, 1.0
    %v893 = vadd.f32 %v877, 1.0
    %v894 = vadd.f32 %v878, 1.0
    %v895 = vadd.f32 %v879, 1.0
    %v896 = vadd.f32 %v880, 1.0
    %v897 = vmul.f32 %v833, %v881
    %v898 = vmul.f32 %v834, %v882
    %v899 = vmul.f32 %v835, %v883
    %v900 = vmul.f32 %v836, %v884
    %v901 = vmul.f32 %v837, %v885
    %v902 = vmul.f32 %v838, %v886
    %v903 = vmul.f32 %v839, %v887
    %v904 = vmul.f32 %v840, %v888
    %v905 = vmul.f32 %v841, %v889
    %v906 = vmul.f32 %v842, %v890
    %v907 = vmul.f32 %v843, %v891
    %v908 = vmul.f32 %v844, %v892
    %v909 = vmul.f32 %v845, %v893
    %v910 = vmul.f32 %v846, %v894
    %v911 = vmul.f32 %v847, %v895
    %v912 = vmul.f32 %v848, %v896
    %v913 = vpack.c.bf16 %v898, %v897
    %v914 = vpack.c.bf16 %v900, %v899
    %v915 = vpack.c.bf16 %v902, %v901
    %v916 = vpack.c.bf16 %v904, %v903
    %v917 = vpack.c.bf16 %v906, %v905
    %v918 = vpack.c.bf16 %v908, %v907
    %v919 = vpack.c.bf16 %v910, %v909
    %v920 = vpack.c.bf16 %v912, %v911
    %921 = vmatprep.subr.bf16.mxu0 0
    %922 = vmatpush1.bf16.msra.mxu0 %v166
    %923 = vmatprep.subr.bf16.mxu0 0
    %924 = vmatpush1.bf16.msra.mxu0 %v165
    %925 = vmatprep.subr.bf16.mxu0 0
    %926 = vmatpush1.bf16.msra.mxu0 %v164
    %927 = vmatprep.subr.bf16.mxu0 0
    %928 = vmatpush1.bf16.msra.mxu0 %v163
    %929 = vmatprep.subr.bf16.mxu0 0
    %930 = vmatpush1.bf16.msra.mxu0 %v162
    %931 = vmatprep.subr.bf16.mxu0 0
    %932 = vmatpush1.bf16.msra.mxu0 %v161
    %933 = vmatprep.subr.bf16.mxu0 0
    %934 = vmatpush1.bf16.msra.mxu0 %v160
    %935 = vmatprep.subr.bf16.mxu0 0
    %936 = vmatpush1.bf16.msra.mxu0 %v159
    %937 = vmatprep.subr.bf16.mxu0 0
    %938 = vmatpush2.bf16.msra.mxu0 0
    %939 = vmatprep.subr.bf16.mxu0 0
    %940 = vmatpush2.bf16.msra.mxu0 0
    %941 = vmatprep.subr.bf16.mxu0 0
    %942 = vmatpush2.bf16.msra.mxu0 0
    %943 = vmatprep.subr.bf16.mxu0 0
    %944 = vmatpush2.bf16.msra.mxu0 0
    %945 = vmatprep.subr.bf16.mxu0 0
    %946 = vmatpush2.bf16.msra.mxu0 0
    %947 = vmatprep.subr.bf16.mxu0 0
    %948 = vmatpush2.bf16.msra.mxu0 0
    %949 = vmatprep.subr.bf16.mxu0 0
    %950 = vmatpush2.bf16.msra.mxu0 0
    %951 = vmatprep.subr.bf16.mxu0 0
    %952 = vmatpush2.bf16.msra.mxu0 0
    %953 = vmatprep.mubr.bf16.mxu0 0
    %954 = vmatmul.mubr.bf16.gmra.mxu0 %v913
    %v955 = vpop.f32.mrf.mxu0
    %v956 = vadd.f32 %v125, %v955
    %v957 = vpop.f32.mrf.mxu0
    %v958 = vpop.f32.mrf.mxu0
    %v959 = vadd.f32 %v125, %v958
    %v960 = vpop.f32.mrf.mxu0
    %961 = vmatprep.mubr.bf16.mxu0 0
    %962 = vmatmul.mubr.bf16.gmra.mxu0 %v914
    %v963 = vpop.f32.mrf.mxu0
    %v964 = vadd.f32 %v125, %v963
    %v965 = vpop.f32.mrf.mxu0
    %v966 = vpop.f32.mrf.mxu0
    %v967 = vadd.f32 %v125, %v966
    %v968 = vpop.f32.mrf.mxu0
    %969 = vmatprep.mubr.bf16.mxu0 0
    %970 = vmatmul.mubr.bf16.gmra.mxu0 %v915
    %v971 = vpop.f32.mrf.mxu0
    %v972 = vadd.f32 %v125, %v971
    %v973 = vpop.f32.mrf.mxu0
    %v974 = vpop.f32.mrf.mxu0
    %v975 = vadd.f32 %v125, %v974
    %v976 = vpop.f32.mrf.mxu0
    %977 = vmatprep.mubr.bf16.mxu0 0
    %978 = vmatmul.mubr.bf16.gmra.mxu0 %v916
    %v979 = vpop.f32.mrf.mxu0
    %v980 = vadd.f32 %v125, %v979
    %v981 = vpop.f32.mrf.mxu0
    %v982 = vpop.f32.mrf.mxu0
    %v983 = vadd.f32 %v125, %v982
    %v984 = vpop.f32.mrf.mxu0
    %985 = vmatprep.mubr.bf16.mxu0 0
    %986 = vmatmul.mubr.bf16.gmra.mxu0 %v917
    %v987 = vpop.f32.mrf.mxu0
    %v988 = vadd.f32 %v125, %v987
    %v989 = vpop.f32.mrf.mxu0
    %v990 = vpop.f32.mrf.mxu0
    %v991 = vadd.f32 %v125, %v990
    %v992 = vpop.f32.mrf.mxu0
    %993 = vmatprep.mubr.bf16.mxu0 0
    %994 = vmatmul.mubr.bf16.gmra.mxu0 %v918
    %v995 = vpop.f32.mrf.mxu0
    %v996 = vadd.f32 %v125, %v995
    %v997 = vpop.f32.mrf.mxu0
    %v998 = vpop.f32.mrf.mxu0
    %v999 = vadd.f32 %v125, %v998
    %v1000 = vpop.f32.mrf.mxu0
    %1001 = vmatprep.mubr.bf16.mxu0 0
    %1002 = vmatmul.mubr.bf16.gmra.mxu0 %v919
    %v1003 = vpop.f32.mrf.mxu0
    %v1004 = vadd.f32 %v125, %v1003
    %v1005 = vpop.f32.mrf.mxu0
    %v1006 = vpop.f32.mrf.mxu0
    %v1007 = vadd.f32 %v125, %v1006
    %v1008 = vpop.f32.mrf.mxu0
    %1009 = vmatprep.mubr.bf16.mxu0 0
    %1010 = vmatmul.mubr.bf16.gmra.mxu0 %v920
    %v1011 = vpop.f32.mrf.mxu0
    %v1012 = vadd.f32 %v125, %v1011
    %v1013 = vpop.f32.mrf.mxu0
    %v1014 = vpop.f32.mrf.mxu0
    %v1015 = vadd.f32 %v125, %v1014
    %v1016 = vpop.f32.mrf.mxu0
    %1017 = vdwg.mxu0
    %v1018 = vmul.f32 %v956, 0.5
    %v1019 = vmul.f32 %v959, 0.5
    %v1020 = vmul.f32 %v964, 0.5
    %v1021 = vmul.f32 %v967, 0.5
    %v1022 = vmul.f32 %v972, 0.5
    %v1023 = vmul.f32 %v975, 0.5
    %v1024 = vmul.f32 %v980, 0.5
    %v1025 = vmul.f32 %v983, 0.5
    %v1026 = vmul.f32 %v988, 0.5
    %v1027 = vmul.f32 %v991, 0.5
    %v1028 = vmul.f32 %v996, 0.5
    %v1029 = vmul.f32 %v999, 0.5
    %v1030 = vmul.f32 %v1004, 0.5
    %v1031 = vmul.f32 %v1007, 0.5
    %v1032 = vmul.f32 %v1012, 0.5
    %v1033 = vmul.f32 %v1015, 0.5
    %v1034 = vmul.f32 %v956, 0.70710677
    %v1035 = vmul.f32 %v959, 0.70710677
    %v1036 = vmul.f32 %v964, 0.70710677
    %v1037 = vmul.f32 %v967, 0.70710677
    %v1038 = vmul.f32 %v972, 0.70710677
    %v1039 = vmul.f32 %v975, 0.70710677
    %v1040 = vmul.f32 %v980, 0.70710677
    %v1041 = vmul.f32 %v983, 0.70710677
    %v1042 = vmul.f32 %v988, 0.70710677
    %v1043 = vmul.f32 %v991, 0.70710677
    %v1044 = vmul.f32 %v996, 0.70710677
    %v1045 = vmul.f32 %v999, 0.70710677
    %v1046 = vmul.f32 %v1004, 0.70710677
    %v1047 = vmul.f32 %v1007, 0.70710677
    %v1048 = vmul.f32 %v1012, 0.70710677
    %v1049 = vmul.f32 %v1015, 0.70710677
    %v1050 = verf.f32.pop %v1034
    %v1051 = verf.f32.pop %v1035
    %v1052 = verf.f32.pop %v1036
    %v1053 = verf.f32.pop %v1037
    %v1054 = verf.f32.pop %v1038
    %v1055 = verf.f32.pop %v1039
    %v1056 = verf.f32.pop %v1040
    %v1057 = verf.f32.pop %v1041
    %v1058 = verf.f32.pop %v1042
    %v1059 = verf.f32.pop %v1043
    %v1060 = verf.f32.pop %v1044
    %v1061 = verf.f32.pop %v1045
    %v1062 = verf.f32.pop %v1046
    %v1063 = verf.f32.pop %v1047
    %v1064 = verf.f32.pop %v1048
    %v1065 = verf.f32.pop %v1049
    %v1066 = vadd.f32 %v1050, 1.0
    %v1067 = vadd.f32 %v1051, 1.0
    %v1068 = vadd.f32 %v1052, 1.0
    %v1069 = vadd.f32 %v1053, 1.0
    %v1070 = vadd.f32 %v1054, 1.0
    %v1071 = vadd.f32 %v1055, 1.0
    %v1072 = vadd.f32 %v1056, 1.0
    %v1073 = vadd.f32 %v1057, 1.0
    %v1074 = vadd.f32 %v1058, 1.0
    %v1075 = vadd.f32 %v1059, 1.0
    %v1076 = vadd.f32 %v1060, 1.0
    %v1077 = vadd.f32 %v1061, 1.0
    %v1078 = vadd.f32 %v1062, 1.0
    %v1079 = vadd.f32 %v1063, 1.0
    %v1080 = vadd.f32 %v1064, 1.0
    %v1081 = vadd.f32 %v1065, 1.0
    %v1082 = vmul.f32 %v1018, %v1066
    %v1083 = vmul.f32 %v1019, %v1067
    %v1084 = vmul.f32 %v1020, %v1068
    %v1085 = vmul.f32 %v1021, %v1069
    %v1086 = vmul.f32 %v1022, %v1070
    %v1087 = vmul.f32 %v1023, %v1071
    %v1088 = vmul.f32 %v1024, %v1072
    %v1089 = vmul.f32 %v1025, %v1073
    %v1090 = vmul.f32 %v1026, %v1074
    %v1091 = vmul.f32 %v1027, %v1075
    %v1092 = vmul.f32 %v1028, %v1076
    %v1093 = vmul.f32 %v1029, %v1077
    %v1094 = vmul.f32 %v1030, %v1078
    %v1095 = vmul.f32 %v1031, %v1079
    %v1096 = vmul.f32 %v1032, %v1080
    %v1097 = vmul.f32 %v1033, %v1081
    %v1098 = vpack.c.bf16 %v1083, %v1082
    %v1099 = vpack.c.bf16 %v1085, %v1084
    %v1100 = vpack.c.bf16 %v1087, %v1086
    %v1101 = vpack.c.bf16 %v1089, %v1088
    %v1102 = vpack.c.bf16 %v1091, %v1090
    %v1103 = vpack.c.bf16 %v1093, %v1092
    %v1104 = vpack.c.bf16 %v1095, %v1094
    %v1105 = vpack.c.bf16 %v1097, %v1096
    %1106 = vmatprep.subr.bf16.mxu0 0
    %1107 = vmatpush1.bf16.msra.mxu0 %v590
    %1108 = vmatprep.subr.bf16.mxu0 0
    %1109 = vmatpush1.bf16.msra.mxu0 %v589
    %1110 = vmatprep.subr.bf16.mxu0 0
    %1111 = vmatpush1.bf16.msra.mxu0 %v588
    %1112 = vmatprep.subr.bf16.mxu0 0
    %1113 = vmatpush1.bf16.msra.mxu0 %v587
    %1114 = vmatprep.subr.bf16.mxu0 0
    %1115 = vmatpush1.bf16.msra.mxu0 %v586
    %1116 = vmatprep.subr.bf16.mxu0 0
    %1117 = vmatpush1.bf16.msra.mxu0 %v585
    %1118 = vmatprep.subr.bf16.mxu0 0
    %1119 = vmatpush1.bf16.msra.mxu0 %v584
    %1120 = vmatprep.subr.bf16.mxu0 0
    %1121 = vmatpush1.bf16.msra.mxu0 %v583
    %1122 = vmatprep.subr.bf16.mxu0 0
    %1123 = vmatpush2.bf16.msra.mxu0 0
    %1124 = vmatprep.subr.bf16.mxu0 0
    %1125 = vmatpush2.bf16.msra.mxu0 0
    %1126 = vmatprep.subr.bf16.mxu0 0
    %1127 = vmatpush2.bf16.msra.mxu0 0
    %1128 = vmatprep.subr.bf16.mxu0 0
    %1129 = vmatpush2.bf16.msra.mxu0 0
    %1130 = vmatprep.subr.bf16.mxu0 0
    %1131 = vmatpush2.bf16.msra.mxu0 0
    %1132 = vmatprep.subr.bf16.mxu0 0
    %1133 = vmatpush2.bf16.msra.mxu0 0
    %1134 = vmatprep.subr.bf16.mxu0 0
    %1135 = vmatpush2.bf16.msra.mxu0 0
    %1136 = vmatprep.subr.bf16.mxu0 0
    %1137 = vmatpush2.bf16.msra.mxu0 0
    %1138 = vmatprep.mubr.bf16.mxu0 0
    %1139 = vmatmul.mubr.bf16.gmra.mxu0 %v1098
    %v1140 = vpop.f32.mrf.mxu0
    %v1141 = vadd.f32 %v549, %v1140
    %v1142 = vpop.f32.mrf.mxu0
    %v1143 = vpop.f32.mrf.mxu0
    %v1144 = vadd.f32 %v549, %v1143
    %v1145 = vpop.f32.mrf.mxu0
    %1146 = vmatprep.mubr.bf16.mxu0 0
    %1147 = vmatmul.mubr.bf16.gmra.mxu0 %v1099
    %v1148 = vpop.f32.mrf.mxu0
    %v1149 = vadd.f32 %v549, %v1148
    %v1150 = vpop.f32.mrf.mxu0
    %v1151 = vpop.f32.mrf.mxu0
    %v1152 = vadd.f32 %v549, %v1151
    %v1153 = vpop.f32.mrf.mxu0
    %1154 = vmatprep.mubr.bf16.mxu0 0
    %1155 = vmatmul.mubr.bf16.gmra.mxu0 %v1100
    %v1156 = vpop.f32.mrf.mxu0
    %v1157 = vadd.f32 %v549, %v1156
    %v1158 = vpop.f32.mrf.mxu0
    %v1159 = vpop.f32.mrf.mxu0
    %v1160 = vadd.f32 %v549, %v1159
    %v1161 = vpop.f32.mrf.mxu0
    %1162 = vmatprep.mubr.bf16.mxu0 0
    %1163 = vmatmul.mubr.bf16.gmra.mxu0 %v1101
    %v1164 = vpop.f32.mrf.mxu0
    %v1165 = vadd.f32 %v549, %v1164
    %v1166 = vpop.f32.mrf.mxu0
    %v1167 = vpop.f32.mrf.mxu0
    %v1168 = vadd.f32 %v549, %v1167
    %v1169 = vpop.f32.mrf.mxu0
    %1170 = vmatprep.mubr.bf16.mxu0 0
    %1171 = vmatmul.mubr.bf16.gmra.mxu0 %v1102
    %v1172 = vpop.f32.mrf.mxu0
    %v1173 = vadd.f32 %v549, %v1172
    %v1174 = vpop.f32.mrf.mxu0
    %v1175 = vpop.f32.mrf.mxu0
    %v1176 = vadd.f32 %v549, %v1175
    %v1177 = vpop.f32.mrf.mxu0
    %1178 = vmatprep.mubr.bf16.mxu0 0
    %1179 = vmatmul.mubr.bf16.gmra.mxu0 %v1103
    %v1180 = vpop.f32.mrf.mxu0
    %v1181 = vadd.f32 %v549, %v1180
    %v1182 = vpop.f32.mrf.mxu0
    %v1183 = vpop.f32.mrf.mxu0
    %v1184 = vadd.f32 %v549, %v1183
    %v1185 = vpop.f32.mrf.mxu0
    %1186 = vmatprep.mubr.bf16.mxu0 0
    %1187 = vmatmul.mubr.bf16.gmra.mxu0 %v1104
    %v1188 = vpop.f32.mrf.mxu0
    %v1189 = vadd.f32 %v549, %v1188
    %v1190 = vpop.f32.mrf.mxu0
    %v1191 = vpop.f32.mrf.mxu0
    %v1192 = vadd.f32 %v549, %v1191
    %v1193 = vpop.f32.mrf.mxu0
    %1194 = vmatprep.mubr.bf16.mxu0 0
    %1195 = vmatmul.mubr.bf16.gmra.mxu0 %v1105
    %v1196 = vpop.f32.mrf.mxu0
    %v1197 = vadd.f32 %v549, %v1196
    %v1198 = vpop.f32.mrf.mxu0
    %v1199 = vpop.f32.mrf.mxu0
    %v1200 = vadd.f32 %v549, %v1199
    %v1201 = vpop.f32.mrf.mxu0
    %1202 = vdwg.mxu0
    %1203 = vst [vmem:[#allocation8 + $0x80] sm:$0xff] %v1141
    %1204 = vst [vmem:[#allocation8 + $0x88] sm:$0xff] %v1144
    %1205 = vst [vmem:[#allocation8 + $0x90] sm:$0xff] %v1149
    %1206 = vst [vmem:[#allocation8 + $0x98] sm:$0xff] %v1152
    %1207 = vst [vmem:[#allocation8 + $0xa0] sm:$0xff] %v1157
    %1208 = vst [vmem:[#allocation8 + $0xa8] sm:$0xff] %v1160
    %1209 = vst [vmem:[#allocation8 + $0xb0] sm:$0xff] %v1165
    %1210 = vst [vmem:[#allocation8 + $0xb8] sm:$0xff] %v1168
    %1211 = vst [vmem:[#allocation8 + $0xc0] sm:$0xff] %v1173
    %1212 = vst [vmem:[#allocation8 + $0xc8] sm:$0xff] %v1176
    %1213 = vst [vmem:[#allocation8 + $0xd0] sm:$0xff] %v1181
    %1214 = vst [vmem:[#allocation8 + $0xd8] sm:$0xff] %v1184
    %1215 = vst [vmem:[#allocation8 + $0xe0] sm:$0xff] %v1189
    %1216 = vst [vmem:[#allocation8 + $0xe8] sm:$0xff] %v1192
    %1217 = vst [vmem:[#allocation8 + $0xf0] sm:$0xff] %v1197
    %1218 = vst [vmem:[#allocation8 + $0xf8] sm:$0xff] %v1200
    // Predicated region
    $region34: #{tpu_custom_call.1} parent=1 // pred_check
      _
    $region35: #{tpu_custom_call.1} parent=1 // pred_check_branch
      %1220 = sbr.rel (0) target = $region37
    $region36: #{tpu_custom_call.1} parent=1 // pred_region
      %s1222 = ssub.s32 4096, 4096
      %1223 = vsyncadd [#allocation4], %s1222
      %s1224 = sshll.u32 [#allocation8], 4
      %s1225 = int_to_ptr.vmem [resolvable:$true] %s1224
      %1230 = dma.vmem_to_hbm [thread:$0]  %s1225, 4096, %s5, [#allocation4], 128, 128, 8
    $region37: #{tpu_custom_call.1} parent=1 // pred_fallthru
      _
    // Predicated region
    $region38: #{tpu_custom_call.1} parent=1 // pred_check
      _
    $region39: #{tpu_custom_call.1} parent=1 // pred_check_branch
      %1232 = sbr.rel (0) target = $region41
    $region40: #{tpu_custom_call.1} parent=1 // pred_region
      %1233 = dma.done [#allocation4], 4096
    $region41: #{tpu_custom_call.1} parent=1 // pred_fallthru
      _
    %1234 = vsyncpa [#allocation3], 1
    %1235 = vsyncpa [#allocation6], 1
    %1236 = vsyncpa [#allocation4], 1

</llo_original>
